<compile_context>
chip_gen: v6e
topology: v6e:2x2x1
jax: 0.10.0
libtpu: 0.0.40
codegen_flags: <defaults>
</compile_context>

<pallas_src>
import math
import functools

import jax
import jax.numpy as jnp
from jax.experimental import pallas as pl
from jax.experimental.pallas import tpu as pltpu

NEG_INF = -1e30  # large finite negative: exp(NEG_INF - m) underflows to 0 in
                 # f32, so masked lanes contribute exactly 0 without inf/nan.


def _gelu_tanh(x):
    # matches torch.nn.GELU(approximate='tanh')
    c = math.sqrt(2.0 / math.pi)
    return 0.5 * x * (1.0 + jnp.tanh(c * (x + 0.044715 * x * x * x)))


def _layernorm(h, w, b, eps=1e-5):
    # f32 statistics (torch.nn.LayerNorm, eps=1e-5, biased variance)
    mu = jnp.mean(h, axis=-1, keepdims=True)
    xc = h - mu
    var = jnp.mean(xc * xc, axis=-1, keepdims=True)
    return xc * jax.lax.rsqrt(var + eps) * w + b


# --------------------------------------------------------------------------
# Stage 1: ln_1 + fused QKV projection, row-tiled over (B, T//tq)
#   outputs: q (pre-scaled by 1/sqrt(hd)), K^T (B, C, T), v  — all bf16
# --------------------------------------------------------------------------
def qkv_kernel(x_ref, ln1w_ref, ln1b_ref, wqkv_ref, bqkv_ref,
               q_ref, kt_ref, v_ref, *, n_head):
    x = x_ref[...]                                    # (tr, C) f32
    C = x.shape[-1]
    hd = C // n_head

    h = _layernorm(x, ln1w_ref[0], ln1b_ref[0])
    qkv = jnp.dot(h.astype(jnp.bfloat16), wqkv_ref[...],
                  preferred_element_type=jnp.float32) + bqkv_ref[0]

    scale = 1.0 / math.sqrt(hd)
    q_ref[...] = (qkv[:, 0 * C:1 * C] * scale).astype(q_ref.dtype)  # pre-scaled
    # K emitted pre-transposed: one f32 transpose per row tile here instead of
    # nq*n_head XLU transposes in the stage-2 inner loop.
    kt_ref[...] = jnp.transpose(qkv[:, 1 * C:2 * C]).astype(kt_ref.dtype)
    v_ref[...] = qkv[:, 2 * C:3 * C].astype(v_ref.dtype)


# --------------------------------------------------------------------------
# Stage 2: flash attention over KV tiles + out-proj + residual + ln_2 + MLP
# grid = (B, T//tq, T//tkv), KV axis innermost / "arbitrary"
# --------------------------------------------------------------------------
def attn_mlp_kernel(x_ref, q_ref, kt_ref, v_ref,
                    wpr_ref, bpr_ref, ln2w_ref, ln2b_ref,
                    wfc_ref, bfc_ref, wpj_ref, bpj_ref,
                    o_ref,
                    acc_ref, m_ref, l_ref,
                    *, n_head, tq, tkv, mlp_chunk, heads_per_group):
    qi = pl.program_id(1)
    kv = pl.program_id(2)
    nkv = pl.num_programs(2)

    C = x_ref.shape[-1]
    hd = C // n_head
    hpg = heads_per_group

    @pl.when(kv == 0)
    def _init():
        m_ref[...] = jnp.full_like(m_ref, NEG_INF)
        l_ref[...] = jnp.zeros_like(l_ref)
        acc_ref[...] = jnp.zeros_like(acc_ref)

    q_lo = qi * tq
    q_hi = qi * tq + (tq - 1)
    k_lo = kv * tkv
    k_hi = kv * tkv + (tkv - 1)

    def flash_update(apply_mask):
        q = q_ref[...]                 # (tq, C)  bf16, pre-scaled by 1/sqrt(hd)
        kT = kt_ref[...]               # (C, tkv) bf16
        v = v_ref[...]                 # (tkv, C) bf16
        m_prev_all = m_ref[...]        # (tq, nh) f32
        l_prev_all = l_ref[...]        # (tq, nh) f32

        if apply_mask:
            q_idx = q_lo + jax.lax.broadcasted_iota(jnp.int32, (tq, tkv), 0)
            k_idx = k_lo + jax.lax.broadcasted_iota(jnp.int32, (tq, tkv), 1)
            causal = k_idx <= q_idx

        m_cols, l_cols = [], []
        # Heads processed in groups so the acc RMW is a full (tq, hpg*hd)
        # lane-aligned (128-multiple for hd=64) unmasked load/store.
        for g0 in range(0, n_head, hpg):
            g1 = min(g0 + hpg, n_head)
            pv_parts, alpha_parts = [], []
            for h in range(g0, g1):
                cs = slice(h * hd, (h + 1) * hd)
                # plain (tq,hd)x(hd,tkv) matmul thanks to pre-transposed K
                s = jnp.dot(q[:, cs], kT[cs, :],
                            preferred_element_type=jnp.float32)     # (tq, tkv)
                if apply_mask:
                    s = jnp.where(causal, s, NEG_INF)
                m_prev = m_prev_all[:, h:h + 1]                      # (tq, 1)
                m_new = jnp.maximum(m_prev, jnp.max(s, axis=-1, keepdims=True))
                alpha = jnp.exp(m_prev - m_new)
                # masked lanes: exp(NEG_INF - m_new) underflows to exactly 0
                p = jnp.exp(s - m_new)                               # f32
                l_cols.append(alpha * l_prev_all[:, h:h + 1]
                              + jnp.sum(p, axis=-1, keepdims=True))
                m_cols.append(m_new)
                alpha_parts.append(jnp.broadcast_to(alpha, (tq, hd)))
                pv_parts.append(jnp.dot(p.astype(v.dtype), v[:, cs],
                                        preferred_element_type=jnp.float32))
            gcs = slice(g0 * hd, g1 * hd)
            if g1 - g0 == 1:
                alpha_g, pv_g = alpha_parts[0], pv_parts[0]
            else:
                alpha_g = jnp.concatenate(alpha_parts, axis=-1)
                pv_g = jnp.concatenate(pv_parts, axis=-1)
            acc_ref[:, gcs] = alpha_g * acc_ref[:, gcs] + pv_g
        # single m/l store per KV step instead of one masked store per head
        m_ref[...] = m_cols[0] if n_head == 1 else jnp.concatenate(m_cols, -1)
        l_ref[...] = l_cols[0] if n_head == 1 else jnp.concatenate(l_cols, -1)

    # interior tiles (strictly below the causal diagonal): no masking needed
    @pl.when(k_hi <= q_lo)
    def _interior():
        flash_update(False)

    # diagonal-straddling tiles: apply the causal mask
    @pl.when(jnp.logical_and(k_hi > q_lo, k_lo <= q_hi))
    def _diagonal():
        flash_update(True)

    # fully-masked tiles (k_lo > q_hi): no compute — and thanks to the clamped
    # kv index_map in the wrapper, no K/V DMA was issued for them either.

    @pl.when(kv == nkv - 1)
    def _finalize():
        # deferred softmax normalization (EUP reciprocal, one divide per row)
        inv_l = pl.reciprocal(l_ref[...], approx=True)               # (tq, nh)
        for g0 in range(0, n_head, hpg):
            g1 = min(g0 + hpg, n_head)
            gcs = slice(g0 * hd, g1 * hd)
            parts = [jnp.broadcast_to(inv_l[:, h:h + 1], (tq, hd))
                     for h in range(g0, g1)]
            inv_g = parts[0] if g1 - g0 == 1 else jnp.concatenate(parts, -1)
            acc_ref[:, gcs] = acc_ref[:, gcs] * inv_g

        y = acc_ref[...].astype(jnp.bfloat16)                        # (tq, C)
        attn = jnp.dot(y, wpr_ref[...],
                       preferred_element_type=jnp.float32) + bpr_ref[0]
        x1 = x_ref[...] + attn                                       # f32 residual

        h2 = _layernorm(x1, ln2w_ref[0], ln2b_ref[0]).astype(jnp.bfloat16)

        # MLP, chunked along the 4C hidden dim: no (tq, 4C) intermediate;
        # accumulate into the resident VMEM output block (full-width RMW).
        H = wfc_ref.shape[1]
        o_ref[...] = x1 + bpj_ref[0]
        for c0 in range(0, H, mlp_chunk):
            f = jnp.dot(h2, wfc_ref[:, c0:c0 + mlp_chunk],
                        preferred_element_type=jnp.float32)
            f = f + bfc_ref[0, c0:c0 + mlp_chunk]
            f = _gelu_tanh(f).astype(jnp.bfloat16)
            o_ref[...] += jnp.dot(f, wpj_ref[c0:c0 + mlp_chunk, :],
                                  preferred_element_type=jnp.float32)


# --------------------------------------------------------------------------
# Wrapper
# --------------------------------------------------------------------------
def _default_vmem_limit():
    # Per-generation VMEM budget: ~75% of physical per-core VMEM leaves
    # headroom for Mosaic internal scratch / semaphores / Pallas bookkeeping.
    # (v5e/v6e: 128 MiB -> 96 MiB; v7x: 64 MiB -> 48 MiB.)
    try:
        cap = int(pltpu.get_tpu_info().vmem_capacity_bytes)
        return (cap * 3) // 4
    except Exception:
        return 64 * 1024 * 1024


def gpt2_block(x, params, n_head, *, tq=256, tkv=256, mlp_chunk=512,
               vmem_limit_bytes=None, weight_buffers=None):
    B, T, C = x.shape
    (ln1w, ln1b, wqkv, bqkv, wpr, bpr, ln2w, ln2b, wfc, bfc, wpj, bpj) = params

    assert C % n_head == 0, "n_embd must be divisible by n_head"
    hd = C // n_head
    assert hd % 8 == 0, "head dim must be sublane-aligned (multiple of 8)"

    tq = min(tq, T)
    tkv = min(tkv, T)
    mlp_chunk = min(mlp_chunk, 4 * C)
    assert T % tq == 0 and T % tkv == 0, "seq len must be divisible by tiles"
    assert (tq % 128 == 0) or (tq == T), "tq must be lane-aligned (K^T layout)"
    assert (tkv % 128 == 0) or (tkv == T), "tkv must be lane-aligned (K^T layout)"
    assert (4 * C) % mlp_chunk == 0
    assert (mlp_chunk % 128 == 0) or (mlp_chunk == 4 * C)

    # heads per acc-update group: full 128-lane groups when hd divides 128
    if hd < 128 and 128 % hd == 0:
        hpg = min(128 // hd, n_head)
    else:
        hpg = 1

    # bf16 weights for the MXU; biases / LN params / residual stream stay f32
    bf16 = jnp.bfloat16
    wqkv_b = wqkv.astype(bf16)
    wpr_b = wpr.astype(bf16)
    wfc_b = wfc.astype(bf16)
    wpj_b = wpj.astype(bf16)

    vmem = vmem_limit_bytes if vmem_limit_bytes is not None else _default_vmem_limit()
    cparams = lambda sem: pltpu.CompilerParams(
        dimension_semantics=sem, vmem_limit_bytes=vmem)

    def const_spec(shape, nargs):
        # constant-index (resident) weight/bias blocks
        idx = ((lambda b, i: (0,) * len(shape)) if nargs == 2
               else (lambda b, i, j: (0,) * len(shape)))
        if weight_buffers is None:
            return pl.BlockSpec(shape, idx)
        # e.g. weight_buffers=1 on v7x: halves resident-weight VMEM
        return pl.BlockSpec(shape, idx, pipeline_mode=pl.Buffered(weight_buffers))

    # ---- stage 1: ln_1 + QKV projection (row tiled) ----
    nr = T // tq
    row3 = lambda: pl.BlockSpec((None, tq, C), lambda b, i: (b, i, 0))
    kt_out = pl.BlockSpec((None, C, tq), lambda b, i: (b, 0, i))
    q, kT, v = pl.pallas_call(
        functools.partial(qkv_kernel, n_head=n_head),
        out_shape=(jax.ShapeDtypeStruct((B, T, C), bf16),
                   jax.ShapeDtypeStruct((B, C, T), bf16),
                   jax.ShapeDtypeStruct((B, T, C), bf16)),
        grid_spec=pltpu.PrefetchScalarGridSpec(
            num_scalar_prefetch=0,
            grid=(B, nr),
            in_specs=[
                row3(),                          # x
                const_spec((1, C), 2),           # ln_1 w
                const_spec((1, C), 2),           # ln_1 b
                const_spec((C, 3 * C), 2),       # c_attn W
                const_spec((1, 3 * C), 2),       # c_attn b
            ],
            out_specs=(row3(), kt_out, row3()),
        ),
        compiler_params=cparams(("parallel", "parallel")),
    )(x, ln1w, ln1b, wqkv_b, bqkv)

    # ---- stage 2: flash attention + out-proj + residual + ln_2 + MLP ----
    nq = T // tq
    nkv = T // tkv

    # last KV block containing any unmasked key for query tile i; clamping the
    # block index means causally-skipped steps re-use the previous block and
    # issue NO new K/V DMA.
    last_kv = lambda i: (i * tq + (tq - 1)) // tkv

    qrow = lambda: pl.BlockSpec((None, tq, C), lambda b, i, j: (b, i, 0))
    kt_spec = pl.BlockSpec((None, C, tkv),
                           lambda b, i, j: (b, 0, jnp.minimum(j, last_kv(i))))
    v_spec = pl.BlockSpec((None, tkv, C),
                          lambda b, i, j: (b, jnp.minimum(j, last_kv(i)), 0))

    out = pl.pallas_call(
        functools.partial(attn_mlp_kernel, n_head=n_head, tq=tq, tkv=tkv,
                          mlp_chunk=mlp_chunk, heads_per_group=hpg),
        out_shape=jax.ShapeDtypeStruct((B, T, C), jnp.float32),
        grid_spec=pltpu.PrefetchScalarGridSpec(
            num_scalar_prefetch=0,
            grid=(B, nq, nkv),
            in_specs=[
                qrow(),                          # x (residual stream, f32)
                qrow(),                          # q (bf16, pre-scaled)
                kt_spec,                         # K^T (bf16)
                v_spec,                          # v  (bf16)
                const_spec((C, C), 3),           # attn c_proj W
                const_spec((1, C), 3),           # attn c_proj b
                const_spec((1, C), 3),           # ln_2 w
                const_spec((1, C), 3),           # ln_2 b
                const_spec((C, 4 * C), 3),       # mlp c_fc W
                const_spec((1, 4 * C), 3),       # mlp c_fc b
                const_spec((4 * C, C), 3),       # mlp c_proj W
                const_spec((1, C), 3),           # mlp c_proj b
            ],
            out_specs=pl.BlockSpec((None, tq, C), lambda b, i, j: (b, i, 0)),
            scratch_shapes=[
                pltpu.VMEM((tq, C), jnp.float32),       # acc (unnormalized o)
                pltpu.VMEM((tq, n_head), jnp.float32),  # running max m
                pltpu.VMEM((tq, n_head), jnp.float32),  # running denom l
            ],
        ),
        compiler_params=cparams(("parallel", "parallel", "arbitrary")),
    )(x, q, kT, v, wpr_b, bpr, ln2w, ln2b, wfc_b, bfc, wpj_b, bpj)
    return out


# ---------------- pure-JAX f32 reference (for a sanity check) ----------------
def gpt2_block_ref(x, params, n_head):
    (ln1w, ln1b, wqkv, bqkv, wpr, bpr, ln2w, ln2b, wfc, bfc, wpj, bpj) = params
    B, T, C = x.shape
    hd = C // n_head

    def ln(h, w, b):
        mu = jnp.mean(h, -1, keepdims=True)
        var = jnp.mean((h - mu) ** 2, -1, keepdims=True)
        return (h - mu) / jnp.sqrt(var + 1e-5) * w[0] + b[0]

    h = ln(x, ln1w, ln1b)
    qkv = h @ wqkv + bqkv[0]
    q, k, v = jnp.split(qkv, 3, axis=-1)
    q = q.reshape(B, T, n_head, hd).transpose(0, 2, 1, 3)
    k = k.reshape(B, T, n_head, hd).transpose(0, 2, 1, 3)
    v = v.reshape(B, T, n_head, hd).transpose(0, 2, 1, 3)
    s = jnp.einsum('bhtd,bhsd->bhts', q, k) / math.sqrt(hd)
    mask = jnp.tril(jnp.ones((T, T), bool))
    s = jnp.where(mask[None, None], s, -jnp.inf)
    p = jax.nn.softmax(s, axis=-1)
    y = jnp.einsum('bhts,bhsd->bhtd', p, v).transpose(0, 2, 1, 3).reshape(B, T, C)
    x1 = x + y @ wpr + bpr[0]
    h2 = ln(x1, ln2w, ln2b)
    f = _gelu_tanh(h2 @ wfc + bfc[0])
    return x1 + f @ wpj + bpj[0]


if __name__ == "__main__":
    # Small but lane-aligned shapes: T=256 with tq=tkv=128 exercises the
    # multi-tile flash path (interior / diagonal / DMA-skipped KV tiles) and
    # the clamped K/V index_map; hd=64 matches GPT-2's head dim so head
    # pairing gives full 128-lane accumulator updates.
    B, T, C, n_head = 2, 256, 128, 2

    key = jax.random.PRNGKey(0)
    ks = jax.random.split(key, 13)

    ln1w = 1.0 + 0.1 * jax.random.normal(ks[8], (1, C), jnp.float32)
    ln1b = 0.05 * jax.random.normal(ks[9], (1, C), jnp.float32)
    wqkv = 0.02 * jax.random.normal(ks[0], (C, 3 * C), jnp.float32)
    bqkv = 0.01 * jax.random.normal(ks[1], (1, 3 * C), jnp.float32)
    wpr = 0.02 * jax.random.normal(ks[2], (C, C), jnp.float32)
    bpr = 0.01 * jax.random.normal(ks[3], (1, C), jnp.float32)
    ln2w = 1.0 + 0.1 * jax.random.normal(ks[10], (1, C), jnp.float32)
    ln2b = 0.05 * jax.random.normal(ks[11], (1, C), jnp.float32)
    wfc = 0.02 * jax.random.normal(ks[4], (C, 4 * C), jnp.float32)
    bfc = 0.01 * jax.random.normal(ks[5], (1, 4 * C), jnp.float32)
    wpj = 0.02 * jax.random.normal(ks[6], (4 * C, C), jnp.float32)
    bpj = 0.01 * jax.random.normal(ks[7], (1, C), jnp.float32)
    params = (ln1w, ln1b, wqkv, bqkv, wpr, bpr, ln2w, ln2b, wfc, bfc, wpj, bpj)

    x = jax.random.normal(ks[12], (B, T, C), jnp.float32)

    ref = gpt2_block_ref(x, params, n_head)

    # multi-tile flash path: 2 query tiles x 2 kv tiles, 2 MLP hidden chunks
    out_tiled = jax.block_until_ready(
        gpt2_block(x, params, n_head, tq=128, tkv=128, mlp_chunk=256))
    # default tile sizes (clamped to the problem size: single 256x256 tile)
    out_full = jax.block_until_ready(gpt2_block(x, params, n_head))

    assert out_tiled.shape == (B, T, C)
    # tolerance reflects bf16 matmul inputs (f32 accumulation / statistics)
    # and the approximate reciprocal in the softmax normalization
    assert jnp.allclose(out_tiled, ref, atol=2e-2, rtol=2e-2), "tiled mismatch"
    assert jnp.allclose(out_full, ref, atol=2e-2, rtol=2e-2), "full mismatch"

    print("KERNEL_OK")
</pallas_src>

<mosaic_0001>
module attributes {stable_mosaic.version = 11 : i64} {
  func.func @qkv_kernel(%arg0: i32, %arg1: i32, %arg2: memref<1x128x128xf32, #tpu.memory_space<vmem>>, %arg3: memref<1x128xf32, #tpu.memory_space<vmem>>, %arg4: memref<1x128xf32, #tpu.memory_space<vmem>>, %arg5: memref<128x384xbf16, #tpu.memory_space<vmem>>, %arg6: memref<1x384xf32, #tpu.memory_space<vmem>>, %arg7: memref<1x128x128xbf16, #tpu.memory_space<vmem>>, %arg8: memref<1x128x128xbf16, #tpu.memory_space<vmem>>, %arg9: memref<1x128x128xbf16, #tpu.memory_space<vmem>>) attributes {dimension_semantics = [#tpu.dimension_semantics<parallel>, #tpu.dimension_semantics<parallel>], iteration_bounds = array<i64: 2, 2>, scalar_prefetch = 0 : i64, scratch_operands = 0 : i64, tpu.core_type = #tpu.core_type<tc>, window_params = [{transform_indices = @transform_0, window_bounds = array<i64: 1, 128, 128>}, {pipeline_mode = #tpu.pipeline_mode<synchronous>, transform_indices = @transform_1, window_bounds = array<i64: 1, 128>}, {pipeline_mode = #tpu.pipeline_mode<synchronous>, transform_indices = @transform_2, window_bounds = array<i64: 1, 128>}, {pipeline_mode = #tpu.pipeline_mode<synchronous>, transform_indices = @transform_3, window_bounds = array<i64: 128, 384>}, {pipeline_mode = #tpu.pipeline_mode<synchronous>, transform_indices = @transform_4, window_bounds = array<i64: 1, 384>}, {transform_indices = @transform_5, window_bounds = array<i64: 1, 128, 128>}, {transform_indices = @transform_6, window_bounds = array<i64: 1, 128, 128>}, {transform_indices = @transform_7, window_bounds = array<i64: 1, 128, 128>}]} {
    %c0 = arith.constant 0 : index
    %c0_0 = arith.constant 0 : index
    %c0_1 = arith.constant 0 : index
    %0 = vector.load %arg2[%c0, %c0_0, %c0_1] : memref<1x128x128xf32, #tpu.memory_space<vmem>>, vector<1x128x128xf32>
    %1 = vector.shape_cast %0 : vector<1x128x128xf32> to vector<128x128xf32>
    %c0_2 = arith.constant 0 : index
    %c0_3 = arith.constant 0 : index
    %2 = vector.load %arg3[%c0_2, %c0_3] : memref<1x128xf32, #tpu.memory_space<vmem>>, vector<1x128xf32>
    %3 = vector.shape_cast %2 : vector<1x128xf32> to vector<128xf32>
    %c0_4 = arith.constant 0 : index
    %c0_5 = arith.constant 0 : index
    %4 = vector.load %arg4[%c0_4, %c0_5] : memref<1x128xf32, #tpu.memory_space<vmem>>, vector<1x128xf32>
    %5 = vector.shape_cast %4 : vector<1x128xf32> to vector<128xf32>
    %cst = arith.constant dense<0.000000e+00> : vector<128xf32>
    %6 = vector.multi_reduction <add>, %1, %cst [1] : vector<128x128xf32> to vector<128xf32>
    %7 = vector.shape_cast %6 : vector<128xf32> to vector<128x1xf32>
    %cst_6 = arith.constant 1.280000e+02 : f32
    %8 = vector.broadcast %cst_6 : f32 to vector<128x1xf32>
    %9 = arith.divf %7, %8 : vector<128x1xf32>
    %10 = vector.broadcast %9 : vector<128x1xf32> to vector<128x128xf32>
    %11 = arith.subf %1, %10 : vector<128x128xf32>
    %12 = arith.mulf %11, %11 : vector<128x128xf32>
    %cst_7 = arith.constant dense<0.000000e+00> : vector<128xf32>
    %13 = vector.multi_reduction <add>, %12, %cst_7 [1] : vector<128x128xf32> to vector<128xf32>
    %14 = vector.shape_cast %13 : vector<128xf32> to vector<128x1xf32>
    %cst_8 = arith.constant 1.280000e+02 : f32
    %15 = vector.broadcast %cst_8 : f32 to vector<128x1xf32>
    %16 = arith.divf %14, %15 : vector<128x1xf32>
    %cst_9 = arith.constant 9.99999974E-6 : f32
    %17 = vector.broadcast %cst_9 : f32 to vector<128x1xf32>
    %18 = arith.addf %16, %17 : vector<128x1xf32>
    %19 = math.rsqrt %18 : vector<128x1xf32>
    %20 = vector.broadcast %19 : vector<128x1xf32> to vector<128x128xf32>
    %21 = arith.mulf %11, %20 : vector<128x128xf32>
    %22 = vector.shape_cast %3 : vector<128xf32> to vector<1x128xf32>
    %23 = vector.broadcast %22 : vector<1x128xf32> to vector<128x128xf32>
    %24 = arith.mulf %21, %23 : vector<128x128xf32>
    %25 = vector.shape_cast %5 : vector<128xf32> to vector<1x128xf32>
    %26 = vector.broadcast %25 : vector<1x128xf32> to vector<128x128xf32>
    %27 = arith.addf %24, %26 : vector<128x128xf32>
    %28 = arith.truncf %27 : vector<128x128xf32> to vector<128x128xbf16>
    %c0_10 = arith.constant 0 : index
    %c0_11 = arith.constant 0 : index
    %29 = vector.load %arg5[%c0_10, %c0_11] : memref<128x384xbf16, #tpu.memory_space<vmem>>, vector<128x384xbf16>
    %cst_12 = arith.constant dense<0.000000e+00> : vector<128x384xf32>
    %30 = tpu.matmul %28, %29, %cst_12 {dimension_numbers = #tpu.dot_dimension_numbers<[1], [0], [0], [1], [0, 0, 1, 1], [], []>} : vector<128x128xbf16>, vector<128x384xbf16>, vector<128x384xf32> -> vector<128x384xf32>
    %c0_13 = arith.constant 0 : index
    %c0_14 = arith.constant 0 : index
    %31 = vector.load %arg6[%c0_13, %c0_14] : memref<1x384xf32, #tpu.memory_space<vmem>>, vector<1x384xf32>
    %32 = vector.shape_cast %31 : vector<1x384xf32> to vector<384xf32>
    %33 = vector.shape_cast %32 : vector<384xf32> to vector<1x384xf32>
    %34 = vector.broadcast %33 : vector<1x384xf32> to vector<128x384xf32>
    %35 = arith.addf %30, %34 : vector<128x384xf32>
    %36 = vector.extract_strided_slice %35 {offsets = [0, 0], sizes = [128, 128], strides = [1, 1]} : vector<128x384xf32> to vector<128x128xf32>
    %cst_15 = arith.constant 1.250000e-01 : f32
    %37 = vector.broadcast %cst_15 : f32 to vector<128x128xf32>
    %38 = arith.mulf %36, %37 : vector<128x128xf32>
    %39 = arith.truncf %38 : vector<128x128xf32> to vector<128x128xbf16>
    %c0_16 = arith.constant 0 : index
    %c0_17 = arith.constant 0 : index
    %c0_18 = arith.constant 0 : index
    %40 = vector.load %arg7[%c0_16, %c0_17, %c0_18] : memref<1x128x128xbf16, #tpu.memory_space<vmem>>, vector<1x128x128xbf16>
    %41 = vector.shape_cast %40 : vector<1x128x128xbf16> to vector<128x128xbf16>
    %42 = vector.shape_cast %39 : vector<128x128xbf16> to vector<1x128x128xbf16>
    tpu.vector_store %arg7[%c0_16, %c0_17, %c0_18], %42 {strides = array<i32>} : memref<1x128x128xbf16, #tpu.memory_space<vmem>>, vector<1x128x128xbf16>,
    %43 = vector.extract_strided_slice %35 {offsets = [0, 128], sizes = [128, 128], strides = [1, 1]} : vector<128x384xf32> to vector<128x128xf32>
    %44 = tpu.transpose %43, [1, 0] : vector<128x128xf32> -> vector<128x128xf32>
    %45 = arith.truncf %44 : vector<128x128xf32> to vector<128x128xbf16>
    %c0_19 = arith.constant 0 : index
    %c0_20 = arith.constant 0 : index
    %c0_21 = arith.constant 0 : index
    %46 = vector.load %arg8[%c0_19, %c0_20, %c0_21] : memref<1x128x128xbf16, #tpu.memory_space<vmem>>, vector<1x128x128xbf16>
    %47 = vector.shape_cast %46 : vector<1x128x128xbf16> to vector<128x128xbf16>
    %48 = vector.shape_cast %45 : vector<128x128xbf16> to vector<1x128x128xbf16>
    tpu.vector_store %arg8[%c0_19, %c0_20, %c0_21], %48 {strides = array<i32>} : memref<1x128x128xbf16, #tpu.memory_space<vmem>>, vector<1x128x128xbf16>,
    %49 = vector.extract_strided_slice %35 {offsets = [0, 256], sizes = [128, 128], strides = [1, 1]} : vector<128x384xf32> to vector<128x128xf32>
    %50 = arith.truncf %49 : vector<128x128xf32> to vector<128x128xbf16>
    %c0_22 = arith.constant 0 : index
    %c0_23 = arith.constant 0 : index
    %c0_24 = arith.constant 0 : index
    %51 = vector.load %arg9[%c0_22, %c0_23, %c0_24] : memref<1x128x128xbf16, #tpu.memory_space<vmem>>, vector<1x128x128xbf16>
    %52 = vector.shape_cast %51 : vector<1x128x128xbf16> to vector<128x128xbf16>
    %53 = vector.shape_cast %50 : vector<128x128xbf16> to vector<1x128x128xbf16>
    tpu.vector_store %arg9[%c0_22, %c0_23, %c0_24], %53 {strides = array<i32>} : memref<1x128x128xbf16, #tpu.memory_space<vmem>>, vector<1x128x128xbf16>,
    return
  }
  func.func @transform_0(%arg0: i32, %arg1: i32) -> (i32, i32, i32) {
    %c0_i32 = arith.constant 0 : i32
    %c0_i32_0 = arith.constant 0 : i32
    return %arg0, %arg1, %c0_i32 : i32, i32, i32
  }
  func.func @transform_1(%arg0: i32, %arg1: i32) -> (i32, i32) {
    %c0_i32 = arith.constant 0 : i32
    %c0_i32_0 = arith.constant 0 : i32
    %c0_i32_1 = arith.constant 0 : i32
    return %c0_i32, %c0_i32_0 : i32, i32
  }
  func.func @transform_2(%arg0: i32, %arg1: i32) -> (i32, i32) {
    %c0_i32 = arith.constant 0 : i32
    %c0_i32_0 = arith.constant 0 : i32
    %c0_i32_1 = arith.constant 0 : i32
    return %c0_i32, %c0_i32_0 : i32, i32
  }
  func.func @transform_3(%arg0: i32, %arg1: i32) -> (i32, i32) {
    %c0_i32 = arith.constant 0 : i32
    %c0_i32_0 = arith.constant 0 : i32
    %c0_i32_1 = arith.constant 0 : i32
    return %c0_i32, %c0_i32_0 : i32, i32
  }
  func.func @transform_4(%arg0: i32, %arg1: i32) -> (i32, i32) {
    %c0_i32 = arith.constant 0 : i32
    %c0_i32_0 = arith.constant 0 : i32
    %c0_i32_1 = arith.constant 0 : i32
    return %c0_i32, %c0_i32_0 : i32, i32
  }
  func.func @transform_5(%arg0: i32, %arg1: i32) -> (i32, i32, i32) {
    %c0_i32 = arith.constant 0 : i32
    %c0_i32_0 = arith.constant 0 : i32
    return %arg0, %arg1, %c0_i32 : i32, i32, i32
  }
  func.func @transform_6(%arg0: i32, %arg1: i32) -> (i32, i32, i32) {
    %c0_i32 = arith.constant 0 : i32
    %c0_i32_0 = arith.constant 0 : i32
    return %arg0, %c0_i32, %arg1 : i32, i32, i32
  }
  func.func @transform_7(%arg0: i32, %arg1: i32) -> (i32, i32, i32) {
    %c0_i32 = arith.constant 0 : i32
    %c0_i32_0 = arith.constant 0 : i32
    return %arg0, %arg1, %c0_i32 : i32, i32, i32
  }
}

</mosaic_0001>

<llo_original>
// kernel: tpu_custom_call.1
$region0: #{tpu_custom_call.1}
  #allocation0 [shape = 'u32[]', space=smem, size = 0x4, offset = 0x4, fixed_abs, tag = 'smem constant byte address 0x4 - core index']
  #allocation1 [shape = 'u32[144,128]{1,0:T(1,128)}', space=vmem, size = 0x12000, scoped, tag = 'internal scratch']
  %s0 = inlined_call_operand.hbm [shape: f32[2,256,128], index: 0, kind: input, shape index: {}]
  %s1 = inlined_call_operand.vmem [shape: f32[1,128], index: 1, kind: input, shape index: {}]
  %s2 = inlined_call_operand.vmem [shape: f32[1,128], index: 2, kind: input, shape index: {}]
  %s3 = inlined_call_operand.hbm [shape: bf16[128,384], index: 3, kind: input, shape index: {}]
  %s4 = inlined_call_operand.vmem [shape: f32[1,384], index: 4, kind: input, shape index: {}]
  %s5 = inlined_call_operand.hbm [shape: bf16[2,256,128], index: 5, kind: output, shape index: {0}]
  %s6 = inlined_call_operand.hbm [shape: bf16[2,128,256], index: 6, kind: output, shape index: {1}]
  %s7 = inlined_call_operand.hbm [shape: bf16[2,256,128], index: 7, kind: output, shape index: {2}]
  %8 = xla_tuple %s5, %s6, %s7
  %s9 = sld [smem:[#allocation0]]
  $region77: #{tpu_custom_call.1} parent=0
    _
  %s11 = ssub.s32 1, %s9
  %s12 = scalar_select 0, %s11, %s9
  $region1: #{tpu_custom_call.1} parent=0
    #allocation2 [shape = 'u8[131072]{0}', space=vmem, size = 0x20000, scoped, tag = 'input window, operand 0']
    #allocation3 [shape = 's32[2]{0}', space=sflag, size = 0x8, scoped, tag = 'scoped memory for tpu_custom_call.1']
    #allocation4 [shape = 's32[2]{0}', space=sflag, size = 0x8, scoped, tag = 'scoped memory for tpu_custom_call.1']
    #allocation5 [shape = 'u8[98304]{0}', space=vmem, size = 0x18000, scoped, tag = 'input window, operand 3, single buffered']
    #allocation6 [shape = 's32[1]{0}', space=sflag, size = 0x4, scoped, tag = 'scoped memory for tpu_custom_call.1']
    #allocation7 [shape = 'u8[65536]{0}', space=vmem, size = 0x10000, scoped, tag = 'output window, operand 0']
    #allocation8 [shape = 'u8[65536]{0}', space=vmem, size = 0x10000, scoped, tag = 'output window, operand 1']
    #allocation9 [shape = 's32[2]{0}', space=sflag, size = 0x8, scoped, tag = 'scoped memory for tpu_custom_call.1']
    #allocation10 [shape = 'u8[65536]{0}', space=vmem, size = 0x10000, scoped, tag = 'output window, operand 2']
    %13 = vsyncpa [#allocation3], 0
    %s14 = scalar_lea.sflag [#allocation3], 1
    %15 = vsyncpa %s14, 0
    %16 = vsyncpa [#allocation6], 0
    %17 = vsyncpa [#allocation4], 0
    %s18 = scalar_lea.sflag [#allocation4], 1
    %19 = vsyncpa %s18, 0
    %20 = vsyncpa [#allocation9], 0
    %s21 = scalar_lea.sflag [#allocation9], 1
    %22 = vsyncpa %s21, 0
    loop: start=0, step=1, limit=6
    $region2: #{tpu_custom_call.1} parent=1 // loop_pre_header
      _
    $region3: #{tpu_custom_call.1} parent=1 // loop_header
      %s24 = sphi 0, %s28
      %p25 = scmp.ge.s32.totalorder %s24, 6
      %s31 = sphi 0, %s43
      %s32 = sphi 0, %s39
      %s33 = sphi 0, %s31
      %s34 = sphi 0, %s32
      %s35 = sphi 0, %s33
      %s36 = sphi 0, %s34
      %s48 = sphi 0, %s50
      %s51 = sphi 0, %s48
      %s52 = sphi 0, %s51
      %s68 = sphi 0, %s52
      %s72 = sphi 0, %s72
      %s74 = sphi 0, %s72
      %s75 = sphi 0, %s74
      %s89 = sphi 0, %s75
      %s93 = sphi 0, %s93
      %s95 = sphi 0, %s93
      %s96 = sphi 0, %s95
      %s110 = sphi 0, %s96
      %s114 = sphi 0, %s114
      %s116 = sphi 0, %s114
      %s117 = sphi 0, %s116
      %s131 = sphi 0, %s117
      %s135 = sphi 0, %s135
      %s137 = sphi 0, %s135
      %s138 = sphi 0, %s137
      %s152 = sphi 0, %s138
      %s160 = sphi 0, %s162
      %s163 = sphi 0, %s160
      %s164 = sphi 0, %s163
      %s180 = sphi 0, %s164
      %s188 = sphi 0, %s190
      %s191 = sphi 0, %s188
      %s192 = sphi 0, %s191
      %s208 = sphi 0, %s192
      %s216 = sphi 0, %s218
      %s219 = sphi 0, %s216
      %s220 = sphi 0, %s219
      %s236 = sphi 0, %s220
    $region4: #{tpu_custom_call.1} parent=1 // loop_header_branch
      %27 = sbr.rel (%p25) target = $region8
    $region5: #{tpu_custom_call.1} parent=1 // loop_body
      %s29 = ssub.s32 %s24, 1
      %s30 = ssub.s32 %s24, 2
      %s37 = sadd.s32 1, %s32
      %p38 = scmp.ge.s32.totalorder %s37, 2
      %s39 = scalar_select %p38, 0, %s37
      %s40 = sadd.s32 1, %s31
      %s41 = scalar_select %p38, %s40, %s31
      %p42 = scmp.ge.s32.totalorder %s41, 2
      %s43 = scalar_select %p42, 0, %s41
      %s44 = ssub.s32 %s31, %s43
      %s45 = ssub.s32 %s32, %s39
      %s46 = sor.u32 %s44, %s45
      %p47 = scmp.eq.s32.totalorder %s46, 0
      %s49 = sadd.s32 %s48, 1
      %s50 = scalar_select %p47, %s48, %s49
      %p53 = pneg %p47
      %p54 = scmp.eq.s32.totalorder %s24, 3
      %p55 = por %p53, %p54
      %p56 = scmp.ne.s32.totalorder %s48, %s51
      %p57 = scmp.eq.s32.totalorder %s24, 0
      %p58 = por %p56, %p57
      %p59 = scmp.ne.s32.totalorder %s48, %s51
      %p60 = scmp.eq.s32.totalorder %s29, 3
      %p61 = por %p59, %p60
      %p62 = scmp.ne.s32.totalorder %s51, %s52
      %p63 = scmp.eq.s32.totalorder %s29, 0
      %p64 = por %p62, %p63
      %p65 = scmp.ne.s32.totalorder %s51, %s52
      %p66 = scmp.eq.s32.totalorder %s30, 3
      %p67 = por %p65, %p66
      %p69 = scmp.ne.s32.totalorder %s52, %s68
      %p70 = scmp.eq.s32.totalorder %s30, 0
      %p71 = por %p69, %p70
      %s73 = sadd.s32 %s72, 1
      %p76 = scmp.eq.s32.totalorder %s24, 3
      %p77 = scmp.ne.s32.totalorder %s72, %s74
      %p78 = scmp.eq.s32.totalorder %s24, 0
      %p79 = por %p77, %p78
      %p80 = scmp.ne.s32.totalorder %s72, %s74
      %p81 = scmp.eq.s32.totalorder %s29, 3
      %p82 = por %p80, %p81
      %p83 = scmp.ne.s32.totalorder %s74, %s75
      %p84 = scmp.eq.s32.totalorder %s29, 0
      %p85 = por %p83, %p84
      %p86 = scmp.ne.s32.totalorder %s74, %s75
      %p87 = scmp.eq.s32.totalorder %s30, 3
      %p88 = por %p86, %p87
      %p90 = scmp.ne.s32.totalorder %s75, %s89
      %p91 = scmp.eq.s32.totalorder %s30, 0
      %p92 = por %p90, %p91
      %s94 = sadd.s32 %s93, 1
      %p97 = scmp.eq.s32.totalorder %s24, 3
      %p98 = scmp.ne.s32.totalorder %s93, %s95
      %p99 = scmp.eq.s32.totalorder %s24, 0
      %p100 = por %p98, %p99
      %p101 = scmp.ne.s32.totalorder %s93, %s95
      %p102 = scmp.eq.s32.totalorder %s29, 3
      %p103 = por %p101, %p102
      %p104 = scmp.ne.s32.totalorder %s95, %s96
      %p105 = scmp.eq.s32.totalorder %s29, 0
      %p106 = por %p104, %p105
      %p107 = scmp.ne.s32.totalorder %s95, %s96
      %p108 = scmp.eq.s32.totalorder %s30, 3
      %p109 = por %p107, %p108
      %p111 = scmp.ne.s32.totalorder %s96, %s110
      %p112 = scmp.eq.s32.totalorder %s30, 0
      %p113 = por %p111, %p112
      %s115 = sadd.s32 %s114, 1
      %p118 = scmp.eq.s32.totalorder %s24, 3
      %p119 = scmp.ne.s32.totalorder %s114, %s116
      %p120 = scmp.eq.s32.totalorder %s24, 0
      %p121 = por %p119, %p120
      %p122 = scmp.ne.s32.totalorder %s114, %s116
      %p123 = scmp.eq.s32.totalorder %s29, 3
      %p124 = por %p122, %p123
      %p125 = scmp.ne.s32.totalorder %s116, %s117
      %p126 = scmp.eq.s32.totalorder %s29, 0
      %p127 = por %p125, %p126
      %p128 = scmp.ne.s32.totalorder %s116, %s117
      %p129 = scmp.eq.s32.totalorder %s30, 3
      %p130 = por %p128, %p129
      %p132 = scmp.ne.s32.totalorder %s117, %s131
      %p133 = scmp.eq.s32.totalorder %s30, 0
      %p134 = por %p132, %p133
      %s136 = sadd.s32 %s135, 1
      %p139 = scmp.eq.s32.totalorder %s24, 3
      %p140 = scmp.ne.s32.totalorder %s135, %s137
      %p141 = scmp.eq.s32.totalorder %s24, 0
      %p142 = por %p140, %p141
      %p143 = scmp.ne.s32.totalorder %s135, %s137
      %p144 = scmp.eq.s32.totalorder %s29, 3
      %p145 = por %p143, %p144
      %p146 = scmp.ne.s32.totalorder %s137, %s138
      %p147 = scmp.eq.s32.totalorder %s29, 0
      %p148 = por %p146, %p147
      %p149 = scmp.ne.s32.totalorder %s137, %s138
      %p150 = scmp.eq.s32.totalorder %s30, 3
      %p151 = por %p149, %p150
      %p153 = scmp.ne.s32.totalorder %s138, %s152
      %p154 = scmp.eq.s32.totalorder %s30, 0
      %p155 = por %p153, %p154
      %s156 = ssub.s32 %s31, %s43
      %s157 = ssub.s32 %s32, %s39
      %s158 = sor.u32 %s156, %s157
      %p159 = scmp.eq.s32.totalorder %s158, 0
      %s161 = sadd.s32 %s160, 1
      %s162 = scalar_select %p159, %s160, %s161
      %p165 = pneg %p159
      %p166 = scmp.eq.s32.totalorder %s24, 3
      %p167 = por %p165, %p166
      %p168 = scmp.ne.s32.totalorder %s160, %s163
      %p169 = scmp.eq.s32.totalorder %s24, 0
      %p170 = por %p168, %p169
      %p171 = scmp.ne.s32.totalorder %s160, %s163
      %p172 = scmp.eq.s32.totalorder %s29, 3
      %p173 = por %p171, %p172
      %p174 = scmp.ne.s32.totalorder %s163, %s164
      %p175 = scmp.eq.s32.totalorder %s29, 0
      %p176 = por %p174, %p175
      %p177 = scmp.ne.s32.totalorder %s163, %s164
      %p178 = scmp.eq.s32.totalorder %s30, 3
      %p179 = por %p177, %p178
      %p181 = scmp.ne.s32.totalorder %s164, %s180
      %p182 = scmp.eq.s32.totalorder %s30, 0
      %p183 = por %p181, %p182
      %s184 = ssub.s32 %s31, %s43
      %s185 = ssub.s32 %s32, %s39
      %s186 = sor.u32 %s184, %s185
      %p187 = scmp.eq.s32.totalorder %s186, 0
      %s189 = sadd.s32 %s188, 1
      %s190 = scalar_select %p187, %s188, %s189
      %p193 = pneg %p187
      %p194 = scmp.eq.s32.totalorder %s24, 3
      %p195 = por %p193, %p194
      %p196 = scmp.ne.s32.totalorder %s188, %s191
      %p197 = scmp.eq.s32.totalorder %s24, 0
      %p198 = por %p196, %p197
      %p199 = scmp.ne.s32.totalorder %s188, %s191
      %p200 = scmp.eq.s32.totalorder %s29, 3
      %p201 = por %p199, %p200
      %p202 = scmp.ne.s32.totalorder %s191, %s192
      %p203 = scmp.eq.s32.totalorder %s29, 0
      %p204 = por %p202, %p203
      %p205 = scmp.ne.s32.totalorder %s191, %s192
      %p206 = scmp.eq.s32.totalorder %s30, 3
      %p207 = por %p205, %p206
      %p209 = scmp.ne.s32.totalorder %s192, %s208
      %p210 = scmp.eq.s32.totalorder %s30, 0
      %p211 = por %p209, %p210
      %s212 = ssub.s32 %s31, %s43
      %s213 = ssub.s32 %s32, %s39
      %s214 = sor.u32 %s212, %s213
      %p215 = scmp.eq.s32.totalorder %s214, 0
      %s217 = sadd.s32 %s216, 1
      %s218 = scalar_select %p215, %s216, %s217
      %p221 = pneg %p215
      %p222 = scmp.eq.s32.totalorder %s24, 3
      %p223 = por %p221, %p222
      %p224 = scmp.ne.s32.totalorder %s216, %s219
      %p225 = scmp.eq.s32.totalorder %s24, 0
      %p226 = por %p224, %p225
      %p227 = scmp.ne.s32.totalorder %s216, %s219
      %p228 = scmp.eq.s32.totalorder %s29, 3
      %p229 = por %p227, %p228
      %p230 = scmp.ne.s32.totalorder %s219, %s220
      %p231 = scmp.eq.s32.totalorder %s29, 0
      %p232 = por %p230, %p231
      %p233 = scmp.ne.s32.totalorder %s219, %s220
      %p234 = scmp.eq.s32.totalorder %s30, 3
      %p235 = por %p233, %p234
      %p237 = scmp.ne.s32.totalorder %s220, %s236
      %p238 = scmp.eq.s32.totalorder %s30, 0
      %p239 = por %p237, %p238
      %p240 = scmp.le.s32.totalorder 1, %s24
      %p241 = scmp.lt.s32.totalorder %s24, 5
      %p242 = pnand %p240, %p241
      %p243 = pneg %p242
      // Predicated region
      $region9: #{tpu_custom_call.1} parent=5 // pred_check
        _
      $region10: #{tpu_custom_call.1} parent=5 // pred_check_branch
        %245 = sbr.rel (%p242) target = $region12
      $region11: #{tpu_custom_call.1} parent=5 // pred_region
        %s246 = ssub.s32 %s24, 1
        // Predicated region
        $region13: #{tpu_custom_call.1} parent=11 // pred_check
          %p247 = pneg %p85
        $region14: #{tpu_custom_call.1} parent=11 // pred_check_branch
          %249 = sbr.rel (%p247) target = $region16
        $region15: #{tpu_custom_call.1} parent=11 // pred_region
          _
        $region16: #{tpu_custom_call.1} parent=11 // pred_fallthru
          _
        // Predicated region
        $region17: #{tpu_custom_call.1} parent=11 // pred_check
          %p250 = pneg %p106
        $region18: #{tpu_custom_call.1} parent=11 // pred_check_branch
          %252 = sbr.rel (%p250) target = $region20
        $region19: #{tpu_custom_call.1} parent=11 // pred_region
          _
        $region20: #{tpu_custom_call.1} parent=11 // pred_fallthru
          _
        // Predicated region
        $region21: #{tpu_custom_call.1} parent=11 // pred_check
          %p253 = pneg %p127
        $region22: #{tpu_custom_call.1} parent=11 // pred_check_branch
          %255 = sbr.rel (%p253) target = $region24
        $region23: #{tpu_custom_call.1} parent=11 // pred_region
          %s257 = ssub.s32 3072, 3072
          %258 = vsyncadd [#allocation6], %s257
          %s259 = sshll.u32 [#allocation5], 4
          %s260 = int_to_ptr.vmem [resolvable:$true] %s259
          %265 = dma.hbm_to_vmem [thread:$0]  %s3, 3072, %s260, [#allocation6], 192, 192, 12
        $region24: #{tpu_custom_call.1} parent=11 // pred_fallthru
          _
        // Predicated region
        $region25: #{tpu_custom_call.1} parent=11 // pred_check
          %p266 = pneg %p148
        $region26: #{tpu_custom_call.1} parent=11 // pred_check_branch
          %268 = sbr.rel (%p266) target = $region28
        $region27: #{tpu_custom_call.1} parent=11 // pred_region
          _
        $region28: #{tpu_custom_call.1} parent=11 // pred_fallthru
          _
      $region12: #{tpu_custom_call.1} parent=5 // pred_fallthru
        _
      %p269 = scmp.lt.s32.totalorder %s24, 4
      // Predicated region
      $region29: #{tpu_custom_call.1} parent=5 // pred_check
        %p270 = pneg %p269
      $region30: #{tpu_custom_call.1} parent=5 // pred_check_branch
        %272 = sbr.rel (%p270) target = $region32
      $region31: #{tpu_custom_call.1} parent=5 // pred_region
        // Predicated region
        $region33: #{tpu_custom_call.1} parent=31 // pred_check
          %p273 = pneg %p58
        $region34: #{tpu_custom_call.1} parent=31 // pred_check_branch
          %275 = sbr.rel (%p273) target = $region36
        $region35: #{tpu_custom_call.1} parent=31 // pred_region
          %s276 = sand.u32 %s48, 1
          %s277 = scalar_lea.sflag [#allocation3], %s276
          %s278 = sand.u32 %s48, 1
          %s279 = smul.addr %s278, 128
          %s280 = scalar_lea.vmem [#allocation2], %s279
          %s281 = smul.u32 16, %s32
          %s283 = ssub.s32 2048, 2048
          %284 = vsyncadd %s277, %s283
          %s285 = smul.addr %s31, 32
          %s286 = sadd.s32 %s281, %s285
          %s287 = smul.addr %s286, 128
          %s288 = scalar_lea.hbm %s0, %s287
          %s289 = sshll.u32 %s280, 4
          %s290 = int_to_ptr.vmem [resolvable:$true] %s289
          %295 = dma.hbm_to_vmem [thread:$0]  %s288, 2048, %s290, %s277, 128, 128, 8
        $region36: #{tpu_custom_call.1} parent=31 // pred_fallthru
          _
      $region32: #{tpu_custom_call.1} parent=5 // pred_fallthru
        _
      %p296 = scmp.le.s32.totalorder 1, %s24
      %p297 = scmp.lt.s32.totalorder %s24, 5
      %p298 = pnand %p296, %p297
      %p299 = pneg %p298
      // Predicated region
      $region37: #{tpu_custom_call.1} parent=5 // pred_check
        _
      $region38: #{tpu_custom_call.1} parent=5 // pred_check_branch
        %301 = sbr.rel (%p298) target = $region40
      $region39: #{tpu_custom_call.1} parent=5 // pred_region
        %s302 = ssub.s32 %s24, 1
        %s303 = sand.u32 %s51, 1
        %s304 = scalar_lea.sflag [#allocation3], %s303
        %s305 = sand.u32 %s51, 1
        %s306 = smul.addr %s305, 128
        %s307 = scalar_lea.vmem [#allocation2], %s306
        // Predicated region
        $region41: #{tpu_custom_call.1} parent=39 // pred_check
          %p308 = pneg %p64
        $region42: #{tpu_custom_call.1} parent=39 // pred_check_branch
          %310 = sbr.rel (%p308) target = $region44
        $region43: #{tpu_custom_call.1} parent=39 // pred_region
          %311 = dma.done %s304, 2048
        $region44: #{tpu_custom_call.1} parent=39 // pred_fallthru
          _
        // Predicated region
        $region45: #{tpu_custom_call.1} parent=39 // pred_check
          %p312 = pneg %p127
        $region46: #{tpu_custom_call.1} parent=39 // pred_check_branch
          %314 = sbr.rel (%p312) target = $region48
        $region47: #{tpu_custom_call.1} parent=39 // pred_region
          %315 = dma.done [#allocation6], 3072
        $region48: #{tpu_custom_call.1} parent=39 // pred_fallthru
          _
        %s316 = sand.u32 %s51, 1
        %s317 = scalar_lea.sflag [#allocation3], %s316
        %s318 = sand.u32 %s51, 1
        %s319 = smul.addr %s318, 128
        %s320 = scalar_lea.vmem [#allocation2], %s319
        %p321 = pneg %p64
        %p322 = pneg %p61
        %p323 = pneg %p85
        %p324 = pneg %p82
        %p325 = pneg %p106
        %p326 = pneg %p103
        %p327 = pneg %p127
        %p328 = pneg %p124
        %p329 = pneg %p148
        %p330 = pneg %p145
        %p331 = pneg %p176
        %p332 = pneg %p173
        %s333 = sand.u32 %s163, 1
        %s334 = scalar_lea.sflag [#allocation4], %s333
        %s335 = sand.u32 %s163, 1
        %s336 = smul.addr %s335, 64
        %s337 = scalar_lea.vmem [#allocation7], %s336
        %p338 = pneg %p204
        %p339 = pneg %p201
        %s340 = sand.u32 %s29, 1
        %s341 = scalar_lea.sflag [#allocation9], %s340
        %s342 = sand.u32 %s191, 1
        %s343 = smul.addr %s342, 64
        %s344 = scalar_lea.vmem [#allocation8], %s343
        %p345 = pneg %p232
        %p346 = pneg %p229
        %s347 = sand.u32 %s29, 1
        %s348 = scalar_lea.sflag [#allocation9], %s347
        %s349 = sand.u32 %s219, 1
        %s350 = smul.addr %s349, 64
        %s351 = scalar_lea.vmem [#allocation10], %s350
        %s352 = smul.u32 16, %s34
        %s353 = smul.u32 16, %s34
        %s354 = smul.u32 16, %s34
        %v356 = vld [vmem:[%s307] sm:$0xff]
        %v357 = vld [vmem:[%s307 + $0x8] sm:$0xff]
        %v358 = vld [vmem:[%s307 + $0x10] sm:$0xff]
        %v359 = vld [vmem:[%s307 + $0x18] sm:$0xff]
        %v360 = vld [vmem:[%s307 + $0x20] sm:$0xff]
        %v361 = vld [vmem:[%s307 + $0x28] sm:$0xff]
        %v362 = vld [vmem:[%s307 + $0x30] sm:$0xff]
        %v363 = vld [vmem:[%s307 + $0x38] sm:$0xff]
        %v364 = vld [vmem:[%s307 + $0x40] sm:$0xff]
        %v365 = vld [vmem:[%s307 + $0x48] sm:$0xff]
        %v366 = vld [vmem:[%s307 + $0x50] sm:$0xff]
        %v367 = vld [vmem:[%s307 + $0x58] sm:$0xff]
        %v368 = vld [vmem:[%s307 + $0x60] sm:$0xff]
        %v369 = vld [vmem:[%s307 + $0x68] sm:$0xff]
        %v370 = vld [vmem:[%s307 + $0x70] sm:$0xff]
        %v371 = vld [vmem:[%s307 + $0x78] sm:$0xff]
        %v372 = vld [vmem:[%s1] sm:$0x1]
        %v373 = vld [vmem:[%s2] sm:$0x1]
        %374 = vadd.xlane.f32.xlu0 %v356
        %v375 = vpop.xlane.xlu0 %374
        %376 = vadd.xlane.f32.xlu0 %v357
        %v377 = vpop.xlane.xlu0 %376
        %378 = vadd.xlane.f32.xlu0 %v358
        %v379 = vpop.xlane.xlu0 %378
        %380 = vadd.xlane.f32.xlu0 %v359
        %v381 = vpop.xlane.xlu0 %380
        %382 = vadd.xlane.f32.xlu0 %v360
        %v383 = vpop.xlane.xlu0 %382
        %384 = vadd.xlane.f32.xlu0 %v361
        %v385 = vpop.xlane.xlu0 %384
        %386 = vadd.xlane.f32.xlu0 %v362
        %v387 = vpop.xlane.xlu0 %386
        %388 = vadd.xlane.f32.xlu0 %v363
        %v389 = vpop.xlane.xlu0 %388
        %390 = vadd.xlane.f32.xlu0 %v364
        %v391 = vpop.xlane.xlu0 %390
        %392 = vadd.xlane.f32.xlu0 %v365
        %v393 = vpop.xlane.xlu0 %392
        %394 = vadd.xlane.f32.xlu0 %v366
        %v395 = vpop.xlane.xlu0 %394
        %396 = vadd.xlane.f32.xlu0 %v367
        %v397 = vpop.xlane.xlu0 %396
        %398 = vadd.xlane.f32.xlu0 %v368
        %v399 = vpop.xlane.xlu0 %398
        %400 = vadd.xlane.f32.xlu0 %v369
        %v401 = vpop.xlane.xlu0 %400
        %402 = vadd.xlane.f32.xlu0 %v370
        %v403 = vpop.xlane.xlu0 %402
        %404 = vadd.xlane.f32.xlu0 %v371
        %v405 = vpop.xlane.xlu0 %404
        %v406 = vrcp.pop 128.0
        %v407 = vmul.f32 %v375, %v406
        %v408 = vmul.f32 %v377, %v406
        %v409 = vmul.f32 %v379, %v406
        %v410 = vmul.f32 %v381, %v406
        %v411 = vmul.f32 %v383, %v406
        %v412 = vmul.f32 %v385, %v406
        %v413 = vmul.f32 %v387, %v406
        %v414 = vmul.f32 %v389, %v406
        %v415 = vmul.f32 %v391, %v406
        %v416 = vmul.f32 %v393, %v406
        %v417 = vmul.f32 %v395, %v406
        %v418 = vmul.f32 %v397, %v406
        %v419 = vmul.f32 %v399, %v406
        %v420 = vmul.f32 %v401, %v406
        %v421 = vmul.f32 %v403, %v406
        %v422 = vmul.f32 %v405, %v406
        %v423 = vsub.f32 %v356, %v407
        %v424 = vsub.f32 %v357, %v408
        %v425 = vsub.f32 %v358, %v409
        %v426 = vsub.f32 %v359, %v410
        %v427 = vsub.f32 %v360, %v411
        %v428 = vsub.f32 %v361, %v412
        %v429 = vsub.f32 %v362, %v413
        %v430 = vsub.f32 %v363, %v414
        %v431 = vsub.f32 %v364, %v415
        %v432 = vsub.f32 %v365, %v416
        %v433 = vsub.f32 %v366, %v417
        %v434 = vsub.f32 %v367, %v418
        %v435 = vsub.f32 %v368, %v419
        %v436 = vsub.f32 %v369, %v420
        %v437 = vsub.f32 %v370, %v421
        %v438 = vsub.f32 %v371, %v422
        %v439 = vmul.f32 %v423, %v423
        %v440 = vmul.f32 %v424, %v424
        %v441 = vmul.f32 %v425, %v425
        %v442 = vmul.f32 %v426, %v426
        %v443 = vmul.f32 %v427, %v427
        %v444 = vmul.f32 %v428, %v428
        %v445 = vmul.f32 %v429, %v429
        %v446 = vmul.f32 %v430, %v430
        %v447 = vmul.f32 %v431, %v431
        %v448 = vmul.f32 %v432, %v432
        %v449 = vmul.f32 %v433, %v433
        %v450 = vmul.f32 %v434, %v434
        %v451 = vmul.f32 %v435, %v435
        %v452 = vmul.f32 %v436, %v436
        %v453 = vmul.f32 %v437, %v437
        %v454 = vmul.f32 %v438, %v438
        %455 = vadd.xlane.f32.xlu0 %v439
        %v456 = vpop.xlane.xlu0 %455
        %457 = vadd.xlane.f32.xlu0 %v440
        %v458 = vpop.xlane.xlu0 %457
        %459 = vadd.xlane.f32.xlu0 %v441
        %v460 = vpop.xlane.xlu0 %459
        %461 = vadd.xlane.f32.xlu0 %v442
        %v462 = vpop.xlane.xlu0 %461
        %463 = vadd.xlane.f32.xlu0 %v443
        %v464 = vpop.xlane.xlu0 %463
        %465 = vadd.xlane.f32.xlu0 %v444
        %v466 = vpop.xlane.xlu0 %465
        %467 = vadd.xlane.f32.xlu0 %v445
        %v468 = vpop.xlane.xlu0 %467
        %469 = vadd.xlane.f32.xlu0 %v446
        %v470 = vpop.xlane.xlu0 %469
        %471 = vadd.xlane.f32.xlu0 %v447
        %v472 = vpop.xlane.xlu0 %471
        %473 = vadd.xlane.f32.xlu0 %v448
        %v474 = vpop.xlane.xlu0 %473
        %475 = vadd.xlane.f32.xlu0 %v449
        %v476 = vpop.xlane.xlu0 %475
        %477 = vadd.xlane.f32.xlu0 %v450
        %v478 = vpop.xlane.xlu0 %477
        %479 = vadd.xlane.f32.xlu0 %v451
        %v480 = vpop.xlane.xlu0 %479
        %481 = vadd.xlane.f32.xlu0 %v452
        %v482 = vpop.xlane.xlu0 %481
        %483 = vadd.xlane.f32.xlu0 %v453
        %v484 = vpop.xlane.xlu0 %483
        %485 = vadd.xlane.f32.xlu0 %v454
        %v486 = vpop.xlane.xlu0 %485
        %v487 = vmul.f32 %v456, %v406
        %v488 = vmul.f32 %v458, %v406
        %v489 = vmul.f32 %v460, %v406
        %v490 = vmul.f32 %v462, %v406
        %v491 = vmul.f32 %v464, %v406
        %v492 = vmul.f32 %v466, %v406
        %v493 = vmul.f32 %v468, %v406
        %v494 = vmul.f32 %v470, %v406
        %v495 = vmul.f32 %v472, %v406
        %v496 = vmul.f32 %v474, %v406
        %v497 = vmul.f32 %v476, %v406
        %v498 = vmul.f32 %v478, %v406
        %v499 = vmul.f32 %v480, %v406
        %v500 = vmul.f32 %v482, %v406
        %v501 = vmul.f32 %v484, %v406
        %v502 = vmul.f32 %v486, %v406
        %v503 = vadd.f32 %v487, 1e-05
        %v504 = vadd.f32 %v488, 1e-05
        %v505 = vadd.f32 %v489, 1e-05
        %v506 = vadd.f32 %v490, 1e-05
        %v507 = vadd.f32 %v491, 1e-05
        %v508 = vadd.f32 %v492, 1e-05
        %v509 = vadd.f32 %v493, 1e-05
        %v510 = vadd.f32 %v494, 1e-05
        %v511 = vadd.f32 %v495, 1e-05
        %v512 = vadd.f32 %v496, 1e-05
        %v513 = vadd.f32 %v497, 1e-05
        %v514 = vadd.f32 %v498, 1e-05
        %v515 = vadd.f32 %v499, 1e-05
        %v516 = vadd.f32 %v500, 1e-05
        %v517 = vadd.f32 %v501, 1e-05
        %v518 = vadd.f32 %v502, 1e-05
        %v519 = vrsqrt.pop %v503
        %v520 = vrsqrt.pop %v504
        %v521 = vrsqrt.pop %v505
        %v522 = vrsqrt.pop %v506
        %v523 = vrsqrt.pop %v507
        %v524 = vrsqrt.pop %v508
        %v525 = vrsqrt.pop %v509
        %v526 = vrsqrt.pop %v510
        %v527 = vrsqrt.pop %v511
        %v528 = vrsqrt.pop %v512
        %v529 = vrsqrt.pop %v513
        %v530 = vrsqrt.pop %v514
        %v531 = vrsqrt.pop %v515
        %v532 = vrsqrt.pop %v516
        %v533 = vrsqrt.pop %v517
        %v534 = vrsqrt.pop %v518
        %v535 = vmul.f32 %v423, %v519
        %v536 = vmul.f32 %v424, %v520
        %v537 = vmul.f32 %v425, %v521
        %v538 = vmul.f32 %v426, %v522
        %v539 = vmul.f32 %v427, %v523
        %v540 = vmul.f32 %v428, %v524
        %v541 = vmul.f32 %v429, %v525
        %v542 = vmul.f32 %v430, %v526
        %v543 = vmul.f32 %v431, %v527
        %v544 = vmul.f32 %v432, %v528
        %v545 = vmul.f32 %v433, %v529
        %v546 = vmul.f32 %v434, %v530
        %v547 = vmul.f32 %v435, %v531
        %v548 = vmul.f32 %v436, %v532
        %v549 = vmul.f32 %v437, %v533
        %v550 = vmul.f32 %v438, %v534
        %v552 = vlaneseq
        %v553 = vshrl.u32 %v552, 7
        %v554 = vsub.s32 0, %v553
        %v555 = vrot.slane %v372, %v554
        %v557 = vmul.f32 %v535, %v555
        %v558 = vmul.f32 %v536, %v555
        %v559 = vmul.f32 %v537, %v555
        %v560 = vmul.f32 %v538, %v555
        %v561 = vmul.f32 %v539, %v555
        %v562 = vmul.f32 %v540, %v555
        %v563 = vmul.f32 %v541, %v555
        %v564 = vmul.f32 %v542, %v555
        %v565 = vmul.f32 %v543, %v555
        %v566 = vmul.f32 %v544, %v555
        %v567 = vmul.f32 %v545, %v555
        %v568 = vmul.f32 %v546, %v555
        %v569 = vmul.f32 %v547, %v555
        %v570 = vmul.f32 %v548, %v555
        %v571 = vmul.f32 %v549, %v555
        %v572 = vmul.f32 %v550, %v555
        %v574 = vlaneseq
        %v575 = vshrl.u32 %v574, 7
        %v576 = vsub.s32 0, %v575
        %v577 = vrot.slane %v373, %v576
        %v579 = vadd.f32 %v557, %v577
        %v580 = vadd.f32 %v558, %v577
        %v581 = vadd.f32 %v559, %v577
        %v582 = vadd.f32 %v560, %v577
        %v583 = vadd.f32 %v561, %v577
        %v584 = vadd.f32 %v562, %v577
        %v585 = vadd.f32 %v563, %v577
        %v586 = vadd.f32 %v564, %v577
        %v587 = vadd.f32 %v565, %v577
        %v588 = vadd.f32 %v566, %v577
        %v589 = vadd.f32 %v567, %v577
        %v590 = vadd.f32 %v568, %v577
        %v591 = vadd.f32 %v569, %v577
        %v592 = vadd.f32 %v570, %v577
        %v593 = vadd.f32 %v571, %v577
        %v594 = vadd.f32 %v572, %v577
        %v595 = vpack.c.bf16 %v580, %v579
        %v596 = vpack.c.bf16 %v582, %v581
        %v597 = vpack.c.bf16 %v584, %v583
        %v598 = vpack.c.bf16 %v586, %v585
        %v599 = vpack.c.bf16 %v588, %v587
        %v600 = vpack.c.bf16 %v590, %v589
        %v601 = vpack.c.bf16 %v592, %v591
        %v602 = vpack.c.bf16 %v594, %v593
        %v603 = vld [vmem:[#allocation5] sm:$0xff]
        %v604 = vld [vmem:[#allocation5 + $0x8] sm:$0xf]
        %v605 = vld [vmem:[#allocation5 + $0xc] sm:$0xff]
        %v606 = vld [vmem:[#allocation5 + $0x14] sm:$0xf]
        %v607 = vld [vmem:[#allocation5 + $0x18] sm:$0xff]
        %v608 = vld [vmem:[#allocation5 + $0x20] sm:$0xf]
        %v609 = vld [vmem:[#allocation5 + $0x24] sm:$0xff]
        %v610 = vld [vmem:[#allocation5 + $0x2c] sm:$0xf]
        %v611 = vld [vmem:[#allocation5 + $0x30] sm:$0xff]
        %v612 = vld [vmem:[#allocation5 + $0x38] sm:$0xf]
        %v613 = vld [vmem:[#allocation5 + $0x3c] sm:$0xff]
        %v614 = vld [vmem:[#allocation5 + $0x44] sm:$0xf]
        %v615 = vld [vmem:[#allocation5 + $0x48] sm:$0xff]
        %v616 = vld [vmem:[#allocation5 + $0x50] sm:$0xf]
        %v617 = vld [vmem:[#allocation5 + $0x54] sm:$0xff]
        %v618 = vld [vmem:[#allocation5 + $0x5c] sm:$0xf]
        %v619 = vld [vmem:[#allocation5 + $0x60] sm:$0xff]
        %v620 = vld [vmem:[#allocation5 + $0x68] sm:$0xf]
        %v621 = vld [vmem:[#allocation5 + $0x6c] sm:$0xff]
        %v622 = vld [vmem:[#allocation5 + $0x74] sm:$0xf]
        %v623 = vld [vmem:[#allocation5 + $0x78] sm:$0xff]
        %v624 = vld [vmem:[#allocation5 + $0x80] sm:$0xf]
        %v625 = vld [vmem:[#allocation5 + $0x84] sm:$0xff]
        %v626 = vld [vmem:[#allocation5 + $0x8c] sm:$0xf]
        %v627 = vld [vmem:[#allocation5 + $0x90] sm:$0xff]
        %v628 = vld [vmem:[#allocation5 + $0x98] sm:$0xf]
        %v629 = vld [vmem:[#allocation5 + $0x9c] sm:$0xff]
        %v630 = vld [vmem:[#allocation5 + $0xa4] sm:$0xf]
        %v631 = vld [vmem:[#allocation5 + $0xa8] sm:$0xff]
        %v632 = vld [vmem:[#allocation5 + $0xb0] sm:$0xf]
        %v633 = vld [vmem:[#allocation5 + $0xb4] sm:$0xff]
        %v634 = vld [vmem:[#allocation5 + $0xbc] sm:$0xf]
        %v635 = vld [vmem:[%s4] sm:$0x7]
        %v637 = vlaneseq
        %v638 = vshrl.u32 %v637, 7
        %v639 = vsub.s32 0, %v638
        %v640 = vrot.slane %v635, %v639
        %v641 = vlaneseq
        %v642 = vshrl.u32 %v641, 7
        %v643 = vsub.s32 1, %v642
        %v644 = vrot.slane %v635, %v643
        %v645 = vlaneseq
        %v646 = vshrl.u32 %v645, 7
        %v647 = vsub.s32 2, %v646
        %v648 = vrot.slane %v635, %v647
        %v684 = vunpack.c.l.b16 %v603
        %v685 = vunpack.c.h.b16 %v603
        %v686 = vunpack.c.l.b16 %v604
        %v687 = vunpack.c.l.b16 %v605
        %v688 = vunpack.c.h.b16 %v605
        %v689 = vunpack.c.l.b16 %v606
        %v690 = vunpack.c.l.b16 %v607
        %v691 = vunpack.c.h.b16 %v607
        %v692 = vunpack.c.l.b16 %v608
        %v693 = vunpack.c.l.b16 %v609
        %v694 = vunpack.c.h.b16 %v609
        %v695 = vunpack.c.l.b16 %v610
        %v696 = vunpack.c.l.b16 %v611
        %v697 = vunpack.c.h.b16 %v611
        %v698 = vunpack.c.l.b16 %v612
        %v699 = vunpack.c.l.b16 %v613
        %v700 = vunpack.c.h.b16 %v613
        %v701 = vunpack.c.l.b16 %v614
        %v702 = vunpack.c.l.b16 %v615
        %v703 = vunpack.c.h.b16 %v615
        %v704 = vunpack.c.l.b16 %v616
        %v705 = vunpack.c.l.b16 %v617
        %v706 = vunpack.c.h.b16 %v617
        %v707 = vunpack.c.l.b16 %v618
        %v708 = vunpack.c.l.b16 %v619
        %v709 = vunpack.c.h.b16 %v619
        %v710 = vunpack.c.l.b16 %v620
        %v711 = vunpack.c.l.b16 %v621
        %v712 = vunpack.c.h.b16 %v621
        %v713 = vunpack.c.l.b16 %v622
        %v714 = vunpack.c.l.b16 %v623
        %v715 = vunpack.c.h.b16 %v623
        %v716 = vunpack.c.l.b16 %v624
        %v717 = vunpack.c.l.b16 %v625
        %v718 = vunpack.c.h.b16 %v625
        %v719 = vunpack.c.l.b16 %v626
        %v720 = vunpack.c.l.b16 %v627
        %v721 = vunpack.c.h.b16 %v627
        %v722 = vunpack.c.l.b16 %v628
        %v723 = vunpack.c.l.b16 %v629
        %v724 = vunpack.c.h.b16 %v629
        %v725 = vunpack.c.l.b16 %v630
        %v726 = vunpack.c.l.b16 %v631
        %v727 = vunpack.c.h.b16 %v631
        %v728 = vunpack.c.l.b16 %v632
        %v729 = vunpack.c.l.b16 %v633
        %v730 = vunpack.c.h.b16 %v633
        %v731 = vunpack.c.l.b16 %v634
        %v732 = vpack.c.b16 %v687, %v684
        %v733 = vpack.c.b16 %v688, %v685
        %v734 = vpack.c.b16 %v689, %v686
        %v735 = vpack.c.b16 %v693, %v690
        %v736 = vpack.c.b16 %v694, %v691
        %v737 = vpack.c.b16 %v695, %v692
        %v738 = vpack.c.b16 %v699, %v696
        %v739 = vpack.c.b16 %v700, %v697
        %v740 = vpack.c.b16 %v701, %v698
        %v741 = vpack.c.b16 %v705, %v702
        %v742 = vpack.c.b16 %v706, %v703
        %v743 = vpack.c.b16 %v707, %v704
        %v744 = vpack.c.b16 %v711, %v708
        %v745 = vpack.c.b16 %v712, %v709
        %v746 = vpack.c.b16 %v713, %v710
        %v747 = vpack.c.b16 %v717, %v714
        %v748 = vpack.c.b16 %v718, %v715
        %v749 = vpack.c.b16 %v719, %v716
        %v750 = vpack.c.b16 %v723, %v720
        %v751 = vpack.c.b16 %v724, %v721
        %v752 = vpack.c.b16 %v725, %v722
        %v753 = vpack.c.b16 %v729, %v726
        %v754 = vpack.c.b16 %v730, %v727
        %v755 = vpack.c.b16 %v731, %v728
        %780 = vmatprep.subr.bf16.mxu0 %v754
        %781 = vmatpush1.bf16.msra.mxu0 %v753
        %782 = vmatprep.subr.bf16.mxu0 %v751
        %783 = vmatpush1.bf16.msra.mxu0 %v750
        %784 = vmatprep.subr.bf16.mxu0 %v748
        %785 = vmatpush1.bf16.msra.mxu0 %v747
        %786 = vmatprep.subr.bf16.mxu0 %v745
        %787 = vmatpush1.bf16.msra.mxu0 %v744
        %788 = vmatprep.subr.bf16.mxu0 %v742
        %789 = vmatpush1.bf16.msra.mxu0 %v741
        %790 = vmatprep.subr.bf16.mxu0 %v739
        %791 = vmatpush1.bf16.msra.mxu0 %v738
        %792 = vmatprep.subr.bf16.mxu0 %v736
        %793 = vmatpush1.bf16.msra.mxu0 %v735
        %794 = vmatprep.subr.bf16.mxu0 %v733
        %795 = vmatpush1.bf16.msra.mxu0 %v732
        %796 = vmatprep.subr.bf16.mxu0 0
        %797 = vmatpush2.bf16.msra.mxu0 0
        %798 = vmatprep.subr.bf16.mxu0 0
        %799 = vmatpush2.bf16.msra.mxu0 0
        %800 = vmatprep.subr.bf16.mxu0 0
        %801 = vmatpush2.bf16.msra.mxu0 0
        %802 = vmatprep.subr.bf16.mxu0 0
        %803 = vmatpush2.bf16.msra.mxu0 0
        %804 = vmatprep.subr.bf16.mxu0 0
        %805 = vmatpush2.bf16.msra.mxu0 0
        %806 = vmatprep.subr.bf16.mxu0 0
        %807 = vmatpush2.bf16.msra.mxu0 0
        %808 = vmatprep.subr.bf16.mxu0 0
        %809 = vmatpush2.bf16.msra.mxu0 0
        %810 = vmatprep.subr.bf16.mxu0 0
        %811 = vmatpush2.bf16.msra.mxu0 0
        %812 = vmatprep.mubr.bf16.mxu0 0
        %813 = vmatmul.mubr.bf16.gmra.mxu0 %v595
        %v814 = vpop.f32.mrf.mxu0
        %v815 = vadd.f32 %v640, %v814
        %v816 = vpop.f32.mrf.mxu0
        %v817 = vadd.f32 %v644, %v816
        %v818 = vpop.f32.mrf.mxu0
        %v819 = vadd.f32 %v640, %v818
        %v820 = vpop.f32.mrf.mxu0
        %v821 = vadd.f32 %v644, %v820
        %822 = vmatprep.mubr.bf16.mxu0 0
        %823 = vmatmul.mubr.bf16.gmra.mxu0 %v596
        %v824 = vpop.f32.mrf.mxu0
        %v825 = vadd.f32 %v640, %v824
        %v826 = vpop.f32.mrf.mxu0
        %v827 = vadd.f32 %v644, %v826
        %v828 = vpop.f32.mrf.mxu0
        %v829 = vadd.f32 %v640, %v828
        %v830 = vpop.f32.mrf.mxu0
        %v831 = vadd.f32 %v644, %v830
        %832 = vmatprep.mubr.bf16.mxu0 0
        %833 = vmatmul.mubr.bf16.gmra.mxu0 %v597
        %v834 = vpop.f32.mrf.mxu0
        %v835 = vadd.f32 %v640, %v834
        %v836 = vpop.f32.mrf.mxu0
        %v837 = vadd.f32 %v644, %v836
        %v838 = vpop.f32.mrf.mxu0
        %v839 = vadd.f32 %v640, %v838
        %v840 = vpop.f32.mrf.mxu0
        %v841 = vadd.f32 %v644, %v840
        %842 = vmatprep.mubr.bf16.mxu0 0
        %843 = vmatmul.mubr.bf16.gmra.mxu0 %v598
        %v844 = vpop.f32.mrf.mxu0
        %v845 = vadd.f32 %v640, %v844
        %v846 = vpop.f32.mrf.mxu0
        %v847 = vadd.f32 %v644, %v846
        %v848 = vpop.f32.mrf.mxu0
        %v849 = vadd.f32 %v640, %v848
        %v850 = vpop.f32.mrf.mxu0
        %v851 = vadd.f32 %v644, %v850
        %852 = vmatprep.mubr.bf16.mxu0 0
        %853 = vmatmul.mubr.bf16.gmra.mxu0 %v599
        %v854 = vpop.f32.mrf.mxu0
        %v855 = vadd.f32 %v640, %v854
        %v856 = vpop.f32.mrf.mxu0
        %v857 = vadd.f32 %v644, %v856
        %v858 = vpop.f32.mrf.mxu0
        %v859 = vadd.f32 %v640, %v858
        %v860 = vpop.f32.mrf.mxu0
        %v861 = vadd.f32 %v644, %v860
        %862 = vmatprep.mubr.bf16.mxu0 0
        %863 = vmatmul.mubr.bf16.gmra.mxu0 %v600
        %v864 = vpop.f32.mrf.mxu0
        %v865 = vadd.f32 %v640, %v864
        %v866 = vpop.f32.mrf.mxu0
        %v867 = vadd.f32 %v644, %v866
        %v868 = vpop.f32.mrf.mxu0
        %v869 = vadd.f32 %v640, %v868
        %v870 = vpop.f32.mrf.mxu0
        %v871 = vadd.f32 %v644, %v870
        %872 = vmatprep.mubr.bf16.mxu0 0
        %873 = vmatmul.mubr.bf16.gmra.mxu0 %v601
        %v874 = vpop.f32.mrf.mxu0
        %v875 = vadd.f32 %v640, %v874
        %v876 = vpop.f32.mrf.mxu0
        %v877 = vadd.f32 %v644, %v876
        %v878 = vpop.f32.mrf.mxu0
        %v879 = vadd.f32 %v640, %v878
        %v880 = vpop.f32.mrf.mxu0
        %v881 = vadd.f32 %v644, %v880
        %882 = vmatprep.mubr.bf16.mxu0 0
        %883 = vmatmul.mubr.bf16.gmra.mxu0 %v602
        %v884 = vpop.f32.mrf.mxu0
        %v885 = vadd.f32 %v640, %v884
        %v886 = vpop.f32.mrf.mxu0
        %v887 = vadd.f32 %v644, %v886
        %v888 = vpop.f32.mrf.mxu0
        %v889 = vadd.f32 %v640, %v888
        %v890 = vpop.f32.mrf.mxu0
        %v891 = vadd.f32 %v644, %v890
        %892 = vdwg.mxu0
        %893 = vmatprep.subr.bf16.mxu0 0
        %894 = vmatpush1.bf16.msra.mxu0 %v755
        %895 = vmatprep.subr.bf16.mxu0 0
        %896 = vmatpush1.bf16.msra.mxu0 %v752
        %897 = vmatprep.subr.bf16.mxu0 0
        %898 = vmatpush1.bf16.msra.mxu0 %v749
        %899 = vmatprep.subr.bf16.mxu0 0
        %900 = vmatpush1.bf16.msra.mxu0 %v746
        %901 = vmatprep.subr.bf16.mxu0 0
        %902 = vmatpush1.bf16.msra.mxu0 %v743
        %903 = vmatprep.subr.bf16.mxu0 0
        %904 = vmatpush1.bf16.msra.mxu0 %v740
        %905 = vmatprep.subr.bf16.mxu0 0
        %906 = vmatpush1.bf16.msra.mxu0 %v737
        %907 = vmatprep.subr.bf16.mxu0 0
        %908 = vmatpush1.bf16.msra.mxu0 %v734
        %909 = vmatprep.subr.bf16.mxu0 0
        %910 = vmatpush2.bf16.msra.mxu0 0
        %911 = vmatprep.subr.bf16.mxu0 0
        %912 = vmatpush2.bf16.msra.mxu0 0
        %913 = vmatprep.subr.bf16.mxu0 0
        %914 = vmatpush2.bf16.msra.mxu0 0
        %915 = vmatprep.subr.bf16.mxu0 0
        %916 = vmatpush2.bf16.msra.mxu0 0
        %917 = vmatprep.subr.bf16.mxu0 0
        %918 = vmatpush2.bf16.msra.mxu0 0
        %919 = vmatprep.subr.bf16.mxu0 0
        %920 = vmatpush2.bf16.msra.mxu0 0
        %921 = vmatprep.subr.bf16.mxu0 0
        %922 = vmatpush2.bf16.msra.mxu0 0
        %923 = vmatprep.subr.bf16.mxu0 0
        %924 = vmatpush2.bf16.msra.mxu0 0
        %925 = vmatprep.mubr.bf16.mxu0 0
        %926 = vmatmul.mubr.bf16.gmra.mxu0 %v595
        %v927 = vpop.f32.mrf.mxu0
        %v928 = vadd.f32 %v648, %v927
        %v929 = vpop.f32.mrf.mxu0
        %v930 = vpop.f32.mrf.mxu0
        %v931 = vadd.f32 %v648, %v930
        %v932 = vpop.f32.mrf.mxu0
        %933 = vmatprep.mubr.bf16.mxu0 0
        %934 = vmatmul.mubr.bf16.gmra.mxu0 %v596
        %v935 = vpop.f32.mrf.mxu0
        %v936 = vadd.f32 %v648, %v935
        %v937 = vpop.f32.mrf.mxu0
        %v938 = vpop.f32.mrf.mxu0
        %v939 = vadd.f32 %v648, %v938
        %v940 = vpop.f32.mrf.mxu0
        %941 = vmatprep.mubr.bf16.mxu0 0
        %942 = vmatmul.mubr.bf16.gmra.mxu0 %v597
        %v943 = vpop.f32.mrf.mxu0
        %v944 = vadd.f32 %v648, %v943
        %v945 = vpop.f32.mrf.mxu0
        %v946 = vpop.f32.mrf.mxu0
        %v947 = vadd.f32 %v648, %v946
        %v948 = vpop.f32.mrf.mxu0
        %949 = vmatprep.mubr.bf16.mxu0 0
        %950 = vmatmul.mubr.bf16.gmra.mxu0 %v598
        %v951 = vpop.f32.mrf.mxu0
        %v952 = vadd.f32 %v648, %v951
        %v953 = vpop.f32.mrf.mxu0
        %v954 = vpop.f32.mrf.mxu0
        %v955 = vadd.f32 %v648, %v954
        %v956 = vpop.f32.mrf.mxu0
        %957 = vmatprep.mubr.bf16.mxu0 0
        %958 = vmatmul.mubr.bf16.gmra.mxu0 %v599
        %v959 = vpop.f32.mrf.mxu0
        %v960 = vadd.f32 %v648, %v959
        %v961 = vpop.f32.mrf.mxu0
        %v962 = vpop.f32.mrf.mxu0
        %v963 = vadd.f32 %v648, %v962
        %v964 = vpop.f32.mrf.mxu0
        %965 = vmatprep.mubr.bf16.mxu0 0
        %966 = vmatmul.mubr.bf16.gmra.mxu0 %v600
        %v967 = vpop.f32.mrf.mxu0
        %v968 = vadd.f32 %v648, %v967
        %v969 = vpop.f32.mrf.mxu0
        %v970 = vpop.f32.mrf.mxu0
        %v971 = vadd.f32 %v648, %v970
        %v972 = vpop.f32.mrf.mxu0
        %973 = vmatprep.mubr.bf16.mxu0 0
        %974 = vmatmul.mubr.bf16.gmra.mxu0 %v601
        %v975 = vpop.f32.mrf.mxu0
        %v976 = vadd.f32 %v648, %v975
        %v977 = vpop.f32.mrf.mxu0
        %v978 = vpop.f32.mrf.mxu0
        %v979 = vadd.f32 %v648, %v978
        %v980 = vpop.f32.mrf.mxu0
        %981 = vmatprep.mubr.bf16.mxu0 0
        %982 = vmatmul.mubr.bf16.gmra.mxu0 %v602
        %v983 = vpop.f32.mrf.mxu0
        %v984 = vadd.f32 %v648, %v983
        %v985 = vpop.f32.mrf.mxu0
        %v986 = vpop.f32.mrf.mxu0
        %v987 = vadd.f32 %v648, %v986
        %v988 = vpop.f32.mrf.mxu0
        %989 = vdwg.mxu0
        %v990 = vmul.f32 %v815, 0.125
        %v991 = vmul.f32 %v819, 0.125
        %v992 = vmul.f32 %v825, 0.125
        %v993 = vmul.f32 %v829, 0.125
        %v994 = vmul.f32 %v835, 0.125
        %v995 = vmul.f32 %v839, 0.125
        %v996 = vmul.f32 %v845, 0.125
        %v997 = vmul.f32 %v849, 0.125
        %v998 = vmul.f32 %v855, 0.125
        %v999 = vmul.f32 %v859, 0.125
        %v1000 = vmul.f32 %v865, 0.125
        %v1001 = vmul.f32 %v869, 0.125
        %v1002 = vmul.f32 %v875, 0.125
        %v1003 = vmul.f32 %v879, 0.125
        %v1004 = vmul.f32 %v885, 0.125
        %v1005 = vmul.f32 %v889, 0.125
        %v1006 = vpack.c.bf16 %v991, %v990
        %v1007 = vpack.c.bf16 %v993, %v992
        %v1008 = vpack.c.bf16 %v995, %v994
        %v1009 = vpack.c.bf16 %v997, %v996
        %v1010 = vpack.c.bf16 %v999, %v998
        %v1011 = vpack.c.bf16 %v1001, %v1000
        %v1012 = vpack.c.bf16 %v1003, %v1002
        %v1013 = vpack.c.bf16 %v1005, %v1004
        %v1022 = vunpack.c.l.b16 %v1006
        %v1023 = vunpack.c.h.b16 %v1006
        %v1024 = vunpack.c.l.b16 %v1007
        %v1025 = vunpack.c.h.b16 %v1007
        %v1026 = vunpack.c.l.b16 %v1008
        %v1027 = vunpack.c.h.b16 %v1008
        %v1028 = vunpack.c.l.b16 %v1009
        %v1029 = vunpack.c.h.b16 %v1009
        %v1030 = vunpack.c.l.b16 %v1010
        %v1031 = vunpack.c.h.b16 %v1010
        %v1032 = vunpack.c.l.b16 %v1011
        %v1033 = vunpack.c.h.b16 %v1011
        %v1034 = vunpack.c.l.b16 %v1012
        %v1035 = vunpack.c.h.b16 %v1012
        %v1036 = vunpack.c.l.b16 %v1013
        %v1037 = vunpack.c.h.b16 %v1013
        %v1038 = vpack.c.b16 %v1022, %v1022
        %v1039 = vpack.c.b16 %v1023, %v1023
        %v1040 = vpack.c.b16 %v1024, %v1024
        %v1041 = vpack.c.b16 %v1025, %v1025
        %v1042 = vpack.c.b16 %v1026, %v1026
        %v1043 = vpack.c.b16 %v1027, %v1027
        %v1044 = vpack.c.b16 %v1028, %v1028
        %v1045 = vpack.c.b16 %v1029, %v1029
        %v1046 = vpack.c.b16 %v1030, %v1030
        %v1047 = vpack.c.b16 %v1031, %v1031
        %v1048 = vpack.c.b16 %v1032, %v1032
        %v1049 = vpack.c.b16 %v1033, %v1033
        %v1050 = vpack.c.b16 %v1034, %v1034
        %v1051 = vpack.c.b16 %v1035, %v1035
        %v1052 = vpack.c.b16 %v1036, %v1036
        %v1053 = vpack.c.b16 %v1037, %v1037
        %1070 = vst [vmem:[%s337] sm:$0xf] %v1038
        %1071 = vst [vmem:[%s337 + $0x4] sm:$0xf] %v1039
        %1072 = vst [vmem:[%s337 + $0x8] sm:$0xf] %v1040
        %1073 = vst [vmem:[%s337 + $0xc] sm:$0xf] %v1041
        %1074 = vst [vmem:[%s337 + $0x10] sm:$0xf] %v1042
        %1075 = vst [vmem:[%s337 + $0x14] sm:$0xf] %v1043
        %1076 = vst [vmem:[%s337 + $0x18] sm:$0xf] %v1044
        %1077 = vst [vmem:[%s337 + $0x1c] sm:$0xf] %v1045
        %1078 = vst [vmem:[%s337 + $0x20] sm:$0xf] %v1046
        %1079 = vst [vmem:[%s337 + $0x24] sm:$0xf] %v1047
        %1080 = vst [vmem:[%s337 + $0x28] sm:$0xf] %v1048
        %1081 = vst [vmem:[%s337 + $0x2c] sm:$0xf] %v1049
        %1082 = vst [vmem:[%s337 + $0x30] sm:$0xf] %v1050
        %1083 = vst [vmem:[%s337 + $0x34] sm:$0xf] %v1051
        %1084 = vst [vmem:[%s337 + $0x38] sm:$0xf] %v1052
        %1085 = vst [vmem:[%s337 + $0x3c] sm:$0xf] %v1053
        %1086 = vxpose.xlu0.b32.start [1/16] %v817, 128
        %1087 = vxpose.xlu0.b32.cont [2/16] %v821, 128
        %1088 = vxpose.xlu0.b32.cont [3/16] %v827, 128
        %1089 = vxpose.xlu0.b32.cont [4/16] %v831, 128
        %1090 = vxpose.xlu0.b32.cont [5/16] %v837, 128
        %1091 = vxpose.xlu0.b32.cont [6/16] %v841, 128
        %1092 = vxpose.xlu0.b32.cont [7/16] %v847, 128
        %1093 = vxpose.xlu0.b32.cont [8/16] %v851, 128
        %1094 = vxpose.xlu0.b32.cont [9/16] %v857, 128
        %1095 = vxpose.xlu0.b32.cont [10/16] %v861, 128
        %1096 = vxpose.xlu0.b32.cont [11/16] %v867, 128
        %1097 = vxpose.xlu0.b32.cont [12/16] %v871, 128
        %1098 = vxpose.xlu0.b32.cont [13/16] %v877, 128
        %1099 = vxpose.xlu0.b32.cont [14/16] %v881, 128
        %1100 = vxpose.xlu0.b32.cont [15/16] %v887, 128
        %1101 = vxpose.xlu0.b32.end [16/16] %v891, 128
        %v1102 = vpop.trf.xlu0
        %v1103 = vpop.trf.xlu0
        %v1104 = vpop.trf.xlu0
        %v1105 = vpop.trf.xlu0
        %v1106 = vpop.trf.xlu0
        %v1107 = vpop.trf.xlu0
        %v1108 = vpop.trf.xlu0
        %v1109 = vpop.trf.xlu0
        %v1110 = vpop.trf.xlu0
        %v1111 = vpop.trf.xlu0
        %v1112 = vpop.trf.xlu0
        %v1113 = vpop.trf.xlu0
        %v1114 = vpop.trf.xlu0
        %v1115 = vpop.trf.xlu0
        %v1116 = vpop.trf.xlu0
        %v1117 = vpop.trf.xlu0
        %v1118 = vpack.c.bf16 %v1103, %v1102
        %v1119 = vpack.c.bf16 %v1105, %v1104
        %v1120 = vpack.c.bf16 %v1107, %v1106
        %v1121 = vpack.c.bf16 %v1109, %v1108
        %v1122 = vpack.c.bf16 %v1111, %v1110
        %v1123 = vpack.c.bf16 %v1113, %v1112
        %v1124 = vpack.c.bf16 %v1115, %v1114
        %v1125 = vpack.c.bf16 %v1117, %v1116
        %v1134 = vunpack.c.l.b16 %v1118
        %v1135 = vunpack.c.h.b16 %v1118
        %v1136 = vunpack.c.l.b16 %v1119
        %v1137 = vunpack.c.h.b16 %v1119
        %v1138 = vunpack.c.l.b16 %v1120
        %v1139 = vunpack.c.h.b16 %v1120
        %v1140 = vunpack.c.l.b16 %v1121
        %v1141 = vunpack.c.h.b16 %v1121
        %v1142 = vunpack.c.l.b16 %v1122
        %v1143 = vunpack.c.h.b16 %v1122
        %v1144 = vunpack.c.l.b16 %v1123
        %v1145 = vunpack.c.h.b16 %v1123
        %v1146 = vunpack.c.l.b16 %v1124
        %v1147 = vunpack.c.h.b16 %v1124
        %v1148 = vunpack.c.l.b16 %v1125
        %v1149 = vunpack.c.h.b16 %v1125
        %v1150 = vpack.c.b16 %v1134, %v1134
        %v1151 = vpack.c.b16 %v1135, %v1135
        %v1152 = vpack.c.b16 %v1136, %v1136
        %v1153 = vpack.c.b16 %v1137, %v1137
        %v1154 = vpack.c.b16 %v1138, %v1138
        %v1155 = vpack.c.b16 %v1139, %v1139
        %v1156 = vpack.c.b16 %v1140, %v1140
        %v1157 = vpack.c.b16 %v1141, %v1141
        %v1158 = vpack.c.b16 %v1142, %v1142
        %v1159 = vpack.c.b16 %v1143, %v1143
        %v1160 = vpack.c.b16 %v1144, %v1144
        %v1161 = vpack.c.b16 %v1145, %v1145
        %v1162 = vpack.c.b16 %v1146, %v1146
        %v1163 = vpack.c.b16 %v1147, %v1147
        %v1164 = vpack.c.b16 %v1148, %v1148
        %v1165 = vpack.c.b16 %v1149, %v1149
        %1182 = vst [vmem:[%s344] sm:$0xf] %v1150
        %1183 = vst [vmem:[%s344 + $0x4] sm:$0xf] %v1151
        %1184 = vst [vmem:[%s344 + $0x8] sm:$0xf] %v1152
        %1185 = vst [vmem:[%s344 + $0xc] sm:$0xf] %v1153
        %1186 = vst [vmem:[%s344 + $0x10] sm:$0xf] %v1154
        %1187 = vst [vmem:[%s344 + $0x14] sm:$0xf] %v1155
        %1188 = vst [vmem:[%s344 + $0x18] sm:$0xf] %v1156
        %1189 = vst [vmem:[%s344 + $0x1c] sm:$0xf] %v1157
        %1190 = vst [vmem:[%s344 + $0x20] sm:$0xf] %v1158
        %1191 = vst [vmem:[%s344 + $0x24] sm:$0xf] %v1159
        %1192 = vst [vmem:[%s344 + $0x28] sm:$0xf] %v1160
        %1193 = vst [vmem:[%s344 + $0x2c] sm:$0xf] %v1161
        %1194 = vst [vmem:[%s344 + $0x30] sm:$0xf] %v1162
        %1195 = vst [vmem:[%s344 + $0x34] sm:$0xf] %v1163
        %1196 = vst [vmem:[%s344 + $0x38] sm:$0xf] %v1164
        %1197 = vst [vmem:[%s344 + $0x3c] sm:$0xf] %v1165
        %v1198 = vpack.c.bf16 %v931, %v928
        %v1199 = vpack.c.bf16 %v939, %v936
        %v1200 = vpack.c.bf16 %v947, %v944
        %v1201 = vpack.c.bf16 %v955, %v952
        %v1202 = vpack.c.bf16 %v963, %v960
        %v1203 = vpack.c.bf16 %v971, %v968
        %v1204 = vpack.c.bf16 %v979, %v976
        %v1205 = vpack.c.bf16 %v987, %v984
        %v1214 = vunpack.c.l.b16 %v1198
        %v1215 = vunpack.c.h.b16 %v1198
        %v1216 = vunpack.c.l.b16 %v1199
        %v1217 = vunpack.c.h.b16 %v1199
        %v1218 = vunpack.c.l.b16 %v1200
        %v1219 = vunpack.c.h.b16 %v1200
        %v1220 = vunpack.c.l.b16 %v1201
        %v1221 = vunpack.c.h.b16 %v1201
        %v1222 = vunpack.c.l.b16 %v1202
        %v1223 = vunpack.c.h.b16 %v1202
        %v1224 = vunpack.c.l.b16 %v1203
        %v1225 = vunpack.c.h.b16 %v1203
        %v1226 = vunpack.c.l.b16 %v1204
        %v1227 = vunpack.c.h.b16 %v1204
        %v1228 = vunpack.c.l.b16 %v1205
        %v1229 = vunpack.c.h.b16 %v1205
        %v1230 = vpack.c.b16 %v1214, %v1214
        %v1231 = vpack.c.b16 %v1215, %v1215
        %v1232 = vpack.c.b16 %v1216, %v1216
        %v1233 = vpack.c.b16 %v1217, %v1217
        %v1234 = vpack.c.b16 %v1218, %v1218
        %v1235 = vpack.c.b16 %v1219, %v1219
        %v1236 = vpack.c.b16 %v1220, %v1220
        %v1237 = vpack.c.b16 %v1221, %v1221
        %v1238 = vpack.c.b16 %v1222, %v1222
        %v1239 = vpack.c.b16 %v1223, %v1223
        %v1240 = vpack.c.b16 %v1224, %v1224
        %v1241 = vpack.c.b16 %v1225, %v1225
        %v1242 = vpack.c.b16 %v1226, %v1226
        %v1243 = vpack.c.b16 %v1227, %v1227
        %v1244 = vpack.c.b16 %v1228, %v1228
        %v1245 = vpack.c.b16 %v1229, %v1229
        %1262 = vst [vmem:[%s351] sm:$0xf] %v1230
        %1263 = vst [vmem:[%s351 + $0x4] sm:$0xf] %v1231
        %1264 = vst [vmem:[%s351 + $0x8] sm:$0xf] %v1232
        %1265 = vst [vmem:[%s351 + $0xc] sm:$0xf] %v1233
        %1266 = vst [vmem:[%s351 + $0x10] sm:$0xf] %v1234
        %1267 = vst [vmem:[%s351 + $0x14] sm:$0xf] %v1235
        %1268 = vst [vmem:[%s351 + $0x18] sm:$0xf] %v1236
        %1269 = vst [vmem:[%s351 + $0x1c] sm:$0xf] %v1237
        %1270 = vst [vmem:[%s351 + $0x20] sm:$0xf] %v1238
        %1271 = vst [vmem:[%s351 + $0x24] sm:$0xf] %v1239
        %1272 = vst [vmem:[%s351 + $0x28] sm:$0xf] %v1240
        %1273 = vst [vmem:[%s351 + $0x2c] sm:$0xf] %v1241
        %1274 = vst [vmem:[%s351 + $0x30] sm:$0xf] %v1242
        %1275 = vst [vmem:[%s351 + $0x34] sm:$0xf] %v1243
        %1276 = vst [vmem:[%s351 + $0x38] sm:$0xf] %v1244
        %1277 = vst [vmem:[%s351 + $0x3c] sm:$0xf] %v1245
        %s1278 = sand.u32 %s163, 1
        %s1279 = scalar_lea.sflag [#allocation4], %s1278
        %s1280 = sand.u32 %s163, 1
        %s1281 = smul.addr %s1280, 64
        %s1282 = scalar_lea.vmem [#allocation7], %s1281
        %s1283 = sand.u32 %s29, 1
        %s1284 = scalar_lea.sflag [#allocation9], %s1283
        %s1285 = sand.u32 %s191, 1
        %s1286 = smul.addr %s1285, 64
        %s1287 = scalar_lea.vmem [#allocation8], %s1286
        %s1288 = sand.u32 %s29, 1
        %s1289 = scalar_lea.sflag [#allocation9], %s1288
        %s1290 = sand.u32 %s219, 1
        %s1291 = smul.addr %s1290, 64
        %s1292 = scalar_lea.vmem [#allocation10], %s1291
        // Predicated region
        $region49: #{tpu_custom_call.1} parent=39 // pred_check
          %p1293 = pneg %p173
        $region50: #{tpu_custom_call.1} parent=39 // pred_check_branch
          %1295 = sbr.rel (%p1293) target = $region52
        $region51: #{tpu_custom_call.1} parent=39 // pred_region
          %s1296 = smul.u32 16, %s34
          %s1298 = ssub.s32 1024, 1024
          %1299 = vsyncadd %s1279, %s1298
          %s1300 = smul.addr %s33, 32
          %s1301 = sadd.s32 %s1296, %s1300
          %s1302 = smul.addr %s1301, 64
          %s1303 = scalar_lea.hbm %s5, %s1302
          %s1304 = sshll.u32 %s1282, 4
          %s1305 = int_to_ptr.vmem [resolvable:$true] %s1304
          %1310 = dma.vmem_to_hbm [thread:$0]  %s1305, 1024, %s1303, %s1279, 64, 64, 4
        $region52: #{tpu_custom_call.1} parent=39 // pred_fallthru
          _
        // Predicated region
        $region53: #{tpu_custom_call.1} parent=39 // pred_check
          %p1311 = pneg %p201
        $region54: #{tpu_custom_call.1} parent=39 // pred_check_branch
          %1313 = sbr.rel (%p1311) target = $region56
        $region55: #{tpu_custom_call.1} parent=39 // pred_region
          %s1315 = ssub.s32 1024, 1024
          %1316 = vsyncadd %s1284, %s1315
          %s1317 = smul.addr %s33, 32
          %s1318 = sadd.s32 %s34, %s1317
          %s1319 = smul.addr %s1318, 64
          %s1320 = scalar_lea.hbm %s6, %s1319
          %s1321 = sshll.u32 %s1287, 4
          %s1322 = int_to_ptr.vmem [resolvable:$true] %s1321
          %1327 = dma.vmem_to_hbm [thread:$0]  %s1322, 1024, %s1320, %s1284, 64, 128, 4
        $region56: #{tpu_custom_call.1} parent=39 // pred_fallthru
          _
        // Predicated region
        $region57: #{tpu_custom_call.1} parent=39 // pred_check
          %p1328 = pneg %p229
        $region58: #{tpu_custom_call.1} parent=39 // pred_check_branch
          %1330 = sbr.rel (%p1328) target = $region60
        $region59: #{tpu_custom_call.1} parent=39 // pred_region
          %s1331 = smul.u32 16, %s34
          %s1333 = ssub.s32 1024, 1024
          %1334 = vsyncadd %s1289, %s1333
          %s1335 = smul.addr %s33, 32
          %s1336 = sadd.s32 %s1331, %s1335
          %s1337 = smul.addr %s1336, 64
          %s1338 = scalar_lea.hbm %s7, %s1337
          %s1339 = sshll.u32 %s1292, 4
          %s1340 = int_to_ptr.vmem [resolvable:$true] %s1339
          %1345 = dma.vmem_to_hbm [thread:$0]  %s1340, 1024, %s1338, %s1289, 64, 64, 4
        $region60: #{tpu_custom_call.1} parent=39 // pred_fallthru
          _
      $region40: #{tpu_custom_call.1} parent=5 // pred_fallthru
        _
      %p1346 = scmp.le.s32.totalorder 2, %s24
      // Predicated region
      $region61: #{tpu_custom_call.1} parent=5 // pred_check
        %p1347 = pneg %p1346
      $region62: #{tpu_custom_call.1} parent=5 // pred_check_branch
        %1349 = sbr.rel (%p1347) target = $region64
      $region63: #{tpu_custom_call.1} parent=5 // pred_region
        %s1350 = ssub.s32 %s24, 2
        // Predicated region
        $region65: #{tpu_custom_call.1} parent=63 // pred_check
          %p1351 = pneg %p179
        $region66: #{tpu_custom_call.1} parent=63 // pred_check_branch
          %1353 = sbr.rel (%p1351) target = $region68
        $region67: #{tpu_custom_call.1} parent=63 // pred_region
          %s1354 = sand.u32 %s164, 1
          %s1355 = scalar_lea.sflag [#allocation4], %s1354
          %s1356 = sand.u32 %s164, 1
          %s1357 = smul.addr %s1356, 64
          %s1358 = scalar_lea.vmem [#allocation7], %s1357
          %1359 = dma.done %s1355, 1024
        $region68: #{tpu_custom_call.1} parent=63 // pred_fallthru
          _
        // Predicated region
        $region69: #{tpu_custom_call.1} parent=63 // pred_check
          %p1360 = pneg %p207
        $region70: #{tpu_custom_call.1} parent=63 // pred_check_branch
          %1362 = sbr.rel (%p1360) target = $region72
        $region71: #{tpu_custom_call.1} parent=63 // pred_region
          %s1363 = sand.u32 %s30, 1
          %s1364 = scalar_lea.sflag [#allocation9], %s1363
          %s1365 = sand.u32 %s192, 1
          %s1366 = smul.addr %s1365, 64
          %s1367 = scalar_lea.vmem [#allocation8], %s1366
          %1368 = dma.done %s1364, 1024
        $region72: #{tpu_custom_call.1} parent=63 // pred_fallthru
          _
        // Predicated region
        $region73: #{tpu_custom_call.1} parent=63 // pred_check
          %p1369 = pneg %p235
        $region74: #{tpu_custom_call.1} parent=63 // pred_check_branch
          %1371 = sbr.rel (%p1369) target = $region76
        $region75: #{tpu_custom_call.1} parent=63 // pred_region
          %s1372 = sand.u32 %s30, 1
          %s1373 = scalar_lea.sflag [#allocation9], %s1372
          %s1374 = sand.u32 %s220, 1
          %s1375 = smul.addr %s1374, 64
          %s1376 = scalar_lea.vmem [#allocation10], %s1375
          %1377 = dma.done %s1373, 1024
        $region76: #{tpu_custom_call.1} parent=63 // pred_fallthru
          _
      $region64: #{tpu_custom_call.1} parent=5 // pred_fallthru
        _
    $region6: #{tpu_custom_call.1} parent=1 // loop_footer
      %s28 = sadd.s32 1, %s24
    $region7: #{tpu_custom_call.1} parent=1 // loop_footer_branch
      %23 = sbr.rel target = $region3
    $region8: #{tpu_custom_call.1} parent=1 // loop_exit
      _
    %1378 = vsyncpa [#allocation3], 1
    %s1379 = scalar_lea.sflag [#allocation3], 1
    %1380 = vsyncpa %s1379, 1
    %1381 = vsyncpa [#allocation6], 1
    %1382 = vsyncpa [#allocation4], 1
    %s1383 = scalar_lea.sflag [#allocation4], 1
    %1384 = vsyncpa %s1383, 1
    %1385 = vsyncpa [#allocation9], 1
    %s1386 = scalar_lea.sflag [#allocation9], 1
    %1387 = vsyncpa %s1386, 1

</llo_original>
